<compile_context>
chip_gen: v6e
topology: v6e:2x2x1
jax: 0.10.0
libtpu: 0.0.40
codegen_flags: <defaults>
</compile_context>

<pallas_src>
import functools

import numpy as np
import jax
import jax.numpy as jnp
from jax.experimental import pallas as pl
from jax.experimental.pallas import tpu as pltpu


# ----------------------------------------------------------------------------
# Pallas kernel: fused concat + MLP (ReLU between layers) + LayerNorm.
# ----------------------------------------------------------------------------
def _edge_mlp_kernel(n_linear, src_ref, dest_ref, edge_ref,
                     w0s_ref, w0d_ref, w0e_ref, b0_ref, *rest):
    # rest = (w1, b1, ..., w_{n-1}, b_{n-1}, gamma, beta, out_ref)
    out_ref = rest[-1]
    gamma = rest[-3][...]          # (1, L) f32
    beta = rest[-2][...]           # (1, L) f32

    # First layer with the concat fused into three matmuls (f32 accumulation).
    h = jnp.dot(src_ref[...], w0s_ref[...], preferred_element_type=jnp.float32)
    h = h + jnp.dot(dest_ref[...], w0d_ref[...],
                    preferred_element_type=jnp.float32)
    h = h + jnp.dot(edge_ref[...], w0e_ref[...],
                    preferred_element_type=jnp.float32)
    h = h + b0_ref[...]
    if n_linear > 1:
        h = jnp.maximum(h, 0.0)    # ReLU (f32 VPU)

    # Remaining Linear layers.
    for i in range(1, n_linear):
        wv = rest[2 * (i - 1)][...]      # (D_i, D_{i+1}) compute dtype
        bv = rest[2 * (i - 1) + 1][...]  # (1, D_{i+1}) f32
        h = jnp.dot(h.astype(wv.dtype), wv,
                    preferred_element_type=jnp.float32) + bv
        if i < n_linear - 1:
            h = jnp.maximum(h, 0.0)

    # LayerNorm over features (torch defaults: biased variance, eps=1e-5), f32.
    mean = jnp.mean(h, axis=-1, keepdims=True)
    var = jnp.mean((h - mean) * (h - mean), axis=-1, keepdims=True)
    h = (h - mean) * jax.lax.rsqrt(var + 1e-5)
    out_ref[...] = (h * gamma + beta).astype(out_ref.dtype)


# ----------------------------------------------------------------------------
# Wrapper: tiling over edges, weights pinned in VMEM, tail padding.
# ----------------------------------------------------------------------------
def edge_model_forward(src, dest, edge_attr, params, u=None, batch=None, *,
                       tile_e=1024, compute_dtype=jnp.bfloat16):
    """Matches EdgeModel.forward(src, dest, edge_attr, u, batch); u/batch unused."""
    del u, batch
    weights = params["weights"]
    biases = params["biases"]
    gamma = params["gamma"]
    beta = params["beta"]
    n_linear = len(weights)

    E, N = src.shape
    Ea = edge_attr.shape[1]
    L = weights[-1].shape[1]
    assert weights[0].shape[0] == 2 * N + Ea

    # First-layer weight split at trace time (concat fusion).
    w0 = weights[0]
    w0_src = w0[:N, :].astype(compute_dtype)
    w0_dst = w0[N:2 * N, :].astype(compute_dtype)
    w0_edge = w0[2 * N:, :].astype(compute_dtype)

    def _round_up(a, m):
        return (a + m - 1) // m * m

    # Clamp the row tile so double-buffered input/output tiles stay small
    # (well under the 32 MiB scoped default and v7x's 64 MiB VMEM).
    in_itemsize = np.dtype(compute_dtype).itemsize
    bytes_per_row = 2 * ((2 * N + Ea) * in_itemsize + L * 4)
    max_tile = max(8, (8 * 1024 * 1024 // bytes_per_row) // 8 * 8)
    tile_e = int(min(tile_e, max_tile, _round_up(E, 8)))
    tile_e = max(8, _round_up(tile_e, 8))

    E_pad = _round_up(E, tile_e)
    num_tiles = E_pad // tile_e

    def _pad_rows(x):
        if E_pad == E:
            return x
        return jnp.pad(x, ((0, E_pad - E), (0, 0)))

    src_p = _pad_rows(src).astype(compute_dtype)
    dest_p = _pad_rows(dest).astype(compute_dtype)
    edge_p = _pad_rows(edge_attr).astype(compute_dtype)

    flat_inputs = [src_p, dest_p, edge_p, w0_src, w0_dst, w0_edge,
                   biases[0].astype(jnp.float32)]
    for w, b in zip(weights[1:], biases[1:]):
        flat_inputs.append(w.astype(compute_dtype))
        flat_inputs.append(b.astype(jnp.float32))
    flat_inputs.append(gamma.astype(jnp.float32))
    flat_inputs.append(beta.astype(jnp.float32))

    def _row_spec(ncols):
        # Edge-tile: streamed (and double-buffered) over the grid.
        return pl.BlockSpec((tile_e, ncols), lambda i: (i, 0))

    def _pinned_spec(arr):
        # Whole array, same block every grid step -> stays resident in VMEM.
        nd = arr.ndim
        return pl.BlockSpec(arr.shape, lambda i, _nd=nd: (0,) * _nd)

    in_specs = [_row_spec(N), _row_spec(N), _row_spec(Ea)]
    in_specs += [_pinned_spec(t) for t in flat_inputs[3:]]
    # TODO(synk): latent_size < 128 makes the final store a masked (narrow-lane)
    # vst; an (E, L) -> (E*L/128, 128) reshape would be lane-dense and
    # traffic-neutral, but the sublane->lane reshape inside the kernel is not
    # reliably lowered by Mosaic, and zero-padding L to 128 would 8x the output
    # HBM traffic, so the narrow store is kept.
    out_spec = pl.BlockSpec((tile_e, L), lambda i: (i, 0))

    flops = 2 * E_pad * sum(int(w.shape[0]) * int(w.shape[1]) for w in weights)
    bytes_accessed = (sum(int(t.size) * int(t.dtype.itemsize) for t in flat_inputs)
                      + E_pad * L * 4)
    cost = pl.CostEstimate(flops=flops, transcendentals=E_pad,
                           bytes_accessed=bytes_accessed)

    kernel = functools.partial(_edge_mlp_kernel, n_linear)

    out = pl.pallas_call(
        kernel,
        out_shape=jax.ShapeDtypeStruct((E_pad, L), jnp.float32),
        grid=(num_tiles,),
        in_specs=in_specs,
        out_specs=out_spec,
        compiler_params=pltpu.CompilerParams(
            dimension_semantics=("parallel",)),
        cost_estimate=cost,
    )(*flat_inputs)

    return out[:E]


# ----------------------------------------------------------------------------
# Parameter construction (kaiming-normal weights; small random biases / affine
# so the bias-add and LayerNorm-affine paths are numerically exercised).
# ----------------------------------------------------------------------------
def make_edge_model_params(key, node_latent_size, edge_latent_size,
                           mlp_hidden_size, mlp_n_hidden_layers, latent_size):
    input_size = 2 * node_latent_size + edge_latent_size
    dims = [input_size] + [mlp_hidden_size] * mlp_n_hidden_layers + [latent_size]
    n = len(dims) - 1
    keys = jax.random.split(key, 2 * n + 2)

    weights, biases = [], []
    for i in range(n):
        fan_in, fan_out = dims[i], dims[i + 1]
        std = jnp.sqrt(2.0 / fan_in)  # kaiming normal (relu gain)
        w = std * jax.random.normal(keys[2 * i], (fan_in, fan_out), jnp.float32)
        b = 0.1 * jax.random.normal(keys[2 * i + 1], (1, fan_out), jnp.float32)
        weights.append(w)
        biases.append(b)

    gamma = 1.0 + 0.1 * jax.random.normal(keys[-2], (1, latent_size), jnp.float32)
    beta = 0.1 * jax.random.normal(keys[-1], (1, latent_size), jnp.float32)
    return {"weights": weights, "biases": biases, "gamma": gamma, "beta": beta}


# ----------------------------------------------------------------------------
# Pure-JAX reference (same precision split as the kernel for tight checking).
# ----------------------------------------------------------------------------
def edge_model_reference(src, dest, edge_attr, params,
                         compute_dtype=jnp.float32):
    x = jnp.concatenate([src, dest, edge_attr], axis=1)
    n = len(params["weights"])
    h = x
    for i, (w, b) in enumerate(zip(params["weights"], params["biases"])):
        h = jnp.dot(h.astype(compute_dtype), w.astype(compute_dtype),
                    preferred_element_type=jnp.float32) + b
        if i < n - 1:
            h = jnp.maximum(h, 0.0)
    mean = jnp.mean(h, axis=-1, keepdims=True)
    var = jnp.mean((h - mean) ** 2, axis=-1, keepdims=True)
    h = (h - mean) * jax.lax.rsqrt(var + 1e-5)
    return h * params["gamma"] + params["beta"]


if __name__ == "__main__":
    # Small shapes consistent with EdgeModel.forward; E=200 with tile_e=128
    # exercises the grid (2 steps) and the tail-padding path.
    E = 200
    node_latent_size = 16
    edge_latent_size = 8
    mlp_hidden_size = 32
    mlp_n_hidden_layers = 2
    latent_size = 16
    tile_e = 128

    key = jax.random.PRNGKey(0)
    k_src, k_dst, k_edge, k_par = jax.random.split(key, 4)

    src = jax.random.normal(k_src, (E, node_latent_size), dtype=jnp.float32)
    dest = jax.random.normal(k_dst, (E, node_latent_size), dtype=jnp.float32)
    edge_attr = jax.random.normal(k_edge, (E, edge_latent_size), dtype=jnp.float32)

    params = make_edge_model_params(k_par, node_latent_size, edge_latent_size,
                                    mlp_hidden_size, mlp_n_hidden_layers,
                                    latent_size)

    # f32 matmul path: tight check against the pure-JAX reference.
    out_f32 = edge_model_forward(src, dest, edge_attr, params,
                                 tile_e=tile_e, compute_dtype=jnp.float32)
    out_f32 = jax.block_until_ready(out_f32)
    ref_f32 = edge_model_reference(src, dest, edge_attr, params,
                                   compute_dtype=jnp.float32)
    assert out_f32.shape == (E, latent_size)
    assert jnp.allclose(out_f32, ref_f32, atol=1e-4, rtol=1e-4)

    # bf16 matmul path (production setting): check against bf16-matmul reference.
    out_bf16 = edge_model_forward(src, dest, edge_attr, params,
                                  tile_e=tile_e, compute_dtype=jnp.bfloat16)
    out_bf16 = jax.block_until_ready(out_bf16)
    ref_bf16 = edge_model_reference(src, dest, edge_attr, params,
                                    compute_dtype=jnp.bfloat16)
    assert out_bf16.shape == (E, latent_size)
    assert jnp.allclose(out_bf16, ref_bf16, atol=1e-2, rtol=1e-2)

    print("KERNEL_OK")
</pallas_src>

<mosaic_0001>
module attributes {stable_mosaic.version = 11 : i64} {
  func.func @_edge_mlp_kernel(%arg0: i32, %arg1: memref<128x16xf32, #tpu.memory_space<vmem>>, %arg2: memref<128x16xf32, #tpu.memory_space<vmem>>, %arg3: memref<128x8xf32, #tpu.memory_space<vmem>>, %arg4: memref<16x32xf32, #tpu.memory_space<vmem>>, %arg5: memref<16x32xf32, #tpu.memory_space<vmem>>, %arg6: memref<8x32xf32, #tpu.memory_space<vmem>>, %arg7: memref<1x32xf32, #tpu.memory_space<vmem>>, %arg8: memref<32x32xf32, #tpu.memory_space<vmem>>, %arg9: memref<1x32xf32, #tpu.memory_space<vmem>>, %arg10: memref<32x16xf32, #tpu.memory_space<vmem>>, %arg11: memref<1x16xf32, #tpu.memory_space<vmem>>, %arg12: memref<1x16xf32, #tpu.memory_space<vmem>>, %arg13: memref<1x16xf32, #tpu.memory_space<vmem>>, %arg14: memref<128x16xf32, #tpu.memory_space<vmem>>) attributes {dimension_semantics = [#tpu.dimension_semantics<parallel>], iteration_bounds = array<i64: 2>, scalar_prefetch = 0 : i64, scratch_operands = 0 : i64, tpu.core_type = #tpu.core_type<tc>, window_params = [{transform_indices = @transform_0, window_bounds = array<i64: 128, 16>}, {transform_indices = @transform_1, window_bounds = array<i64: 128, 16>}, {transform_indices = @transform_2, window_bounds = array<i64: 128, 8>}, {pipeline_mode = #tpu.pipeline_mode<synchronous>, transform_indices = @transform_3, window_bounds = array<i64: 16, 32>}, {pipeline_mode = #tpu.pipeline_mode<synchronous>, transform_indices = @transform_4, window_bounds = array<i64: 16, 32>}, {pipeline_mode = #tpu.pipeline_mode<synchronous>, transform_indices = @transform_5, window_bounds = array<i64: 8, 32>}, {pipeline_mode = #tpu.pipeline_mode<synchronous>, transform_indices = @transform_6, window_bounds = array<i64: 1, 32>}, {pipeline_mode = #tpu.pipeline_mode<synchronous>, transform_indices = @transform_7, window_bounds = array<i64: 32, 32>}, {pipeline_mode = #tpu.pipeline_mode<synchronous>, transform_indices = @transform_8, window_bounds = array<i64: 1, 32>}, {pipeline_mode = #tpu.pipeline_mode<synchronous>, transform_indices = @transform_9, window_bounds = array<i64: 32, 16>}, {pipeline_mode = #tpu.pipeline_mode<synchronous>, transform_indices = @transform_10, window_bounds = array<i64: 1, 16>}, {pipeline_mode = #tpu.pipeline_mode<synchronous>, transform_indices = @transform_11, window_bounds = array<i64: 1, 16>}, {pipeline_mode = #tpu.pipeline_mode<synchronous>, transform_indices = @transform_12, window_bounds = array<i64: 1, 16>}, {transform_indices = @transform_13, window_bounds = array<i64: 128, 16>}]} {
    %c0 = arith.constant 0 : index
    %c0_0 = arith.constant 0 : index
    %0 = vector.load %arg12[%c0, %c0_0] : memref<1x16xf32, #tpu.memory_space<vmem>>, vector<1x16xf32>
    %c0_1 = arith.constant 0 : index
    %c0_2 = arith.constant 0 : index
    %1 = vector.load %arg13[%c0_1, %c0_2] : memref<1x16xf32, #tpu.memory_space<vmem>>, vector<1x16xf32>
    %c0_3 = arith.constant 0 : index
    %c0_4 = arith.constant 0 : index
    %2 = vector.load %arg1[%c0_3, %c0_4] : memref<128x16xf32, #tpu.memory_space<vmem>>, vector<128x16xf32>
    %c0_5 = arith.constant 0 : index
    %c0_6 = arith.constant 0 : index
    %3 = vector.load %arg4[%c0_5, %c0_6] : memref<16x32xf32, #tpu.memory_space<vmem>>, vector<16x32xf32>
    %cst = arith.constant dense<0.000000e+00> : vector<128x32xf32>
    %4 = tpu.matmul %2, %3, %cst {dimension_numbers = #tpu.dot_dimension_numbers<[1], [0], [0], [1], [0, 0, 1, 1], [], []>} : vector<128x16xf32>, vector<16x32xf32>, vector<128x32xf32> -> vector<128x32xf32>
    %c0_7 = arith.constant 0 : index
    %c0_8 = arith.constant 0 : index
    %5 = vector.load %arg2[%c0_7, %c0_8] : memref<128x16xf32, #tpu.memory_space<vmem>>, vector<128x16xf32>
    %c0_9 = arith.constant 0 : index
    %c0_10 = arith.constant 0 : index
    %6 = vector.load %arg5[%c0_9, %c0_10] : memref<16x32xf32, #tpu.memory_space<vmem>>, vector<16x32xf32>
    %cst_11 = arith.constant dense<0.000000e+00> : vector<128x32xf32>
    %7 = tpu.matmul %5, %6, %cst_11 {dimension_numbers = #tpu.dot_dimension_numbers<[1], [0], [0], [1], [0, 0, 1, 1], [], []>} : vector<128x16xf32>, vector<16x32xf32>, vector<128x32xf32> -> vector<128x32xf32>
    %8 = arith.addf %4, %7 : vector<128x32xf32>
    %c0_12 = arith.constant 0 : index
    %c0_13 = arith.constant 0 : index
    %9 = vector.load %arg3[%c0_12, %c0_13] : memref<128x8xf32, #tpu.memory_space<vmem>>, vector<128x8xf32>
    %c0_14 = arith.constant 0 : index
    %c0_15 = arith.constant 0 : index
    %10 = vector.load %arg6[%c0_14, %c0_15] : memref<8x32xf32, #tpu.memory_space<vmem>>, vector<8x32xf32>
    %cst_16 = arith.constant dense<0.000000e+00> : vector<128x32xf32>
    %11 = tpu.matmul %9, %10, %cst_16 {dimension_numbers = #tpu.dot_dimension_numbers<[1], [0], [0], [1], [0, 0, 1, 1], [], []>} : vector<128x8xf32>, vector<8x32xf32>, vector<128x32xf32> -> vector<128x32xf32>
    %12 = arith.addf %8, %11 : vector<128x32xf32>
    %c0_17 = arith.constant 0 : index
    %c0_18 = arith.constant 0 : index
    %13 = vector.load %arg7[%c0_17, %c0_18] : memref<1x32xf32, #tpu.memory_space<vmem>>, vector<1x32xf32>
    %14 = vector.broadcast %13 : vector<1x32xf32> to vector<128x32xf32>
    %15 = arith.addf %12, %14 : vector<128x32xf32>
    %cst_19 = arith.constant 0.000000e+00 : f32
    %16 = vector.broadcast %cst_19 : f32 to vector<128x32xf32>
    %17 = arith.maximumf %15, %16 : vector<128x32xf32>
    %c0_20 = arith.constant 0 : index
    %c0_21 = arith.constant 0 : index
    %18 = vector.load %arg8[%c0_20, %c0_21] : memref<32x32xf32, #tpu.memory_space<vmem>>, vector<32x32xf32>
    %c0_22 = arith.constant 0 : index
    %c0_23 = arith.constant 0 : index
    %19 = vector.load %arg9[%c0_22, %c0_23] : memref<1x32xf32, #tpu.memory_space<vmem>>, vector<1x32xf32>
    %cst_24 = arith.constant dense<0.000000e+00> : vector<128x32xf32>
    %20 = tpu.matmul %17, %18, %cst_24 {dimension_numbers = #tpu.dot_dimension_numbers<[1], [0], [0], [1], [0, 0, 1, 1], [], []>} : vector<128x32xf32>, vector<32x32xf32>, vector<128x32xf32> -> vector<128x32xf32>
    %21 = vector.broadcast %19 : vector<1x32xf32> to vector<128x32xf32>
    %22 = arith.addf %20, %21 : vector<128x32xf32>
    %cst_25 = arith.constant 0.000000e+00 : f32
    %23 = vector.broadcast %cst_25 : f32 to vector<128x32xf32>
    %24 = arith.maximumf %22, %23 : vector<128x32xf32>
    %c0_26 = arith.constant 0 : index
    %c0_27 = arith.constant 0 : index
    %25 = vector.load %arg10[%c0_26, %c0_27] : memref<32x16xf32, #tpu.memory_space<vmem>>, vector<32x16xf32>
    %c0_28 = arith.constant 0 : index
    %c0_29 = arith.constant 0 : index
    %26 = vector.load %arg11[%c0_28, %c0_29] : memref<1x16xf32, #tpu.memory_space<vmem>>, vector<1x16xf32>
    %cst_30 = arith.constant dense<0.000000e+00> : vector<128x16xf32>
    %27 = tpu.matmul %24, %25, %cst_30 {dimension_numbers = #tpu.dot_dimension_numbers<[1], [0], [0], [1], [0, 0, 1, 1], [], []>} : vector<128x32xf32>, vector<32x16xf32>, vector<128x16xf32> -> vector<128x16xf32>
    %28 = vector.broadcast %26 : vector<1x16xf32> to vector<128x16xf32>
    %29 = arith.addf %27, %28 : vector<128x16xf32>
    %cst_31 = arith.constant dense<0.000000e+00> : vector<128xf32>
    %30 = vector.multi_reduction <add>, %29, %cst_31 [1] : vector<128x16xf32> to vector<128xf32>
    %31 = vector.shape_cast %30 : vector<128xf32> to vector<128x1xf32>
    %cst_32 = arith.constant 1.600000e+01 : f32
    %32 = vector.broadcast %cst_32 : f32 to vector<128x1xf32>
    %33 = arith.divf %31, %32 : vector<128x1xf32>
    %34 = vector.broadcast %33 : vector<128x1xf32> to vector<128x16xf32>
    %35 = arith.subf %29, %34 : vector<128x16xf32>
    %36 = vector.broadcast %33 : vector<128x1xf32> to vector<128x16xf32>
    %37 = arith.subf %29, %36 : vector<128x16xf32>
    %38 = arith.mulf %35, %37 : vector<128x16xf32>
    %cst_33 = arith.constant dense<0.000000e+00> : vector<128xf32>
    %39 = vector.multi_reduction <add>, %38, %cst_33 [1] : vector<128x16xf32> to vector<128xf32>
    %40 = vector.shape_cast %39 : vector<128xf32> to vector<128x1xf32>
    %cst_34 = arith.constant 1.600000e+01 : f32
    %41 = vector.broadcast %cst_34 : f32 to vector<128x1xf32>
    %42 = arith.divf %40, %41 : vector<128x1xf32>
    %43 = vector.broadcast %33 : vector<128x1xf32> to vector<128x16xf32>
    %44 = arith.subf %29, %43 : vector<128x16xf32>
    %cst_35 = arith.constant 9.99999974E-6 : f32
    %45 = vector.broadcast %cst_35 : f32 to vector<128x1xf32>
    %46 = arith.addf %42, %45 : vector<128x1xf32>
    %47 = math.rsqrt %46 : vector<128x1xf32>
    %48 = vector.broadcast %47 : vector<128x1xf32> to vector<128x16xf32>
    %49 = arith.mulf %44, %48 : vector<128x16xf32>
    %50 = vector.broadcast %0 : vector<1x16xf32> to vector<128x16xf32>
    %51 = arith.mulf %49, %50 : vector<128x16xf32>
    %52 = vector.broadcast %1 : vector<1x16xf32> to vector<128x16xf32>
    %53 = arith.addf %51, %52 : vector<128x16xf32>
    %c0_36 = arith.constant 0 : index
    %c0_37 = arith.constant 0 : index
    %54 = vector.load %arg14[%c0_36, %c0_37] : memref<128x16xf32, #tpu.memory_space<vmem>>, vector<128x16xf32>
    tpu.vector_store %arg14[%c0_36, %c0_37], %53 {strides = array<i32>} : memref<128x16xf32, #tpu.memory_space<vmem>>, vector<128x16xf32>,
    return
  }
  func.func @transform_0(%arg0: i32) -> (i32, i32) {
    %c0_i32 = arith.constant 0 : i32
    %c0_i32_0 = arith.constant 0 : i32
    return %arg0, %c0_i32 : i32, i32
  }
  func.func @transform_1(%arg0: i32) -> (i32, i32) {
    %c0_i32 = arith.constant 0 : i32
    %c0_i32_0 = arith.constant 0 : i32
    return %arg0, %c0_i32 : i32, i32
  }
  func.func @transform_2(%arg0: i32) -> (i32, i32) {
    %c0_i32 = arith.constant 0 : i32
    %c0_i32_0 = arith.constant 0 : i32
    return %arg0, %c0_i32 : i32, i32
  }
  func.func @transform_3(%arg0: i32) -> (i32, i32) {
    %c0_i32 = arith.constant 0 : i32
    %c0_i32_0 = arith.constant 0 : i32
    %c0_i32_1 = arith.constant 0 : i32
    return %c0_i32, %c0_i32_0 : i32, i32
  }
  func.func @transform_4(%arg0: i32) -> (i32, i32) {
    %c0_i32 = arith.constant 0 : i32
    %c0_i32_0 = arith.constant 0 : i32
    %c0_i32_1 = arith.constant 0 : i32
    return %c0_i32, %c0_i32_0 : i32, i32
  }
  func.func @transform_5(%arg0: i32) -> (i32, i32) {
    %c0_i32 = arith.constant 0 : i32
    %c0_i32_0 = arith.constant 0 : i32
    %c0_i32_1 = arith.constant 0 : i32
    return %c0_i32, %c0_i32_0 : i32, i32
  }
  func.func @transform_6(%arg0: i32) -> (i32, i32) {
    %c0_i32 = arith.constant 0 : i32
    %c0_i32_0 = arith.constant 0 : i32
    %c0_i32_1 = arith.constant 0 : i32
    return %c0_i32, %c0_i32_0 : i32, i32
  }
  func.func @transform_7(%arg0: i32) -> (i32, i32) {
    %c0_i32 = arith.constant 0 : i32
    %c0_i32_0 = arith.constant 0 : i32
    %c0_i32_1 = arith.constant 0 : i32
    return %c0_i32, %c0_i32_0 : i32, i32
  }
  func.func @transform_8(%arg0: i32) -> (i32, i32) {
    %c0_i32 = arith.constant 0 : i32
    %c0_i32_0 = arith.constant 0 : i32
    %c0_i32_1 = arith.constant 0 : i32
    return %c0_i32, %c0_i32_0 : i32, i32
  }
  func.func @transform_9(%arg0: i32) -> (i32, i32) {
    %c0_i32 = arith.constant 0 : i32
    %c0_i32_0 = arith.constant 0 : i32
    %c0_i32_1 = arith.constant 0 : i32
    return %c0_i32, %c0_i32_0 : i32, i32
  }
  func.func @transform_10(%arg0: i32) -> (i32, i32) {
    %c0_i32 = arith.constant 0 : i32
    %c0_i32_0 = arith.constant 0 : i32
    %c0_i32_1 = arith.constant 0 : i32
    return %c0_i32, %c0_i32_0 : i32, i32
  }
  func.func @transform_11(%arg0: i32) -> (i32, i32) {
    %c0_i32 = arith.constant 0 : i32
    %c0_i32_0 = arith.constant 0 : i32
    %c0_i32_1 = arith.constant 0 : i32
    return %c0_i32, %c0_i32_0 : i32, i32
  }
  func.func @transform_12(%arg0: i32) -> (i32, i32) {
    %c0_i32 = arith.constant 0 : i32
    %c0_i32_0 = arith.constant 0 : i32
    %c0_i32_1 = arith.constant 0 : i32
    return %c0_i32, %c0_i32_0 : i32, i32
  }
  func.func @transform_13(%arg0: i32) -> (i32, i32) {
    %c0_i32 = arith.constant 0 : i32
    %c0_i32_0 = arith.constant 0 : i32
    return %arg0, %c0_i32 : i32, i32
  }
}

</mosaic_0001>

<llo_original>
// kernel: tpu_custom_call.1
$region0: #{tpu_custom_call.1}
  #allocation0 [shape = 'u32[]', space=smem, size = 0x4, offset = 0x4, fixed_abs, tag = 'smem constant byte address 0x4 - core index']
  #allocation1 [shape = 'u32[144,128]{1,0:T(1,128)}', space=vmem, size = 0x12000, scoped, tag = 'internal scratch']
  %s0 = inlined_call_operand.vmem [shape: f32[256,16], index: 0, kind: input, shape index: {}]
  %s1 = inlined_call_operand.vmem [shape: f32[256,16], index: 1, kind: input, shape index: {}]
  %s2 = inlined_call_operand.vmem [shape: f32[256,8], index: 2, kind: input, shape index: {}]
  %s3 = inlined_call_operand.vmem [shape: f32[16,32], index: 3, kind: input, shape index: {}]
  %s4 = inlined_call_operand.vmem [shape: f32[16,32], index: 4, kind: input, shape index: {}]
  %s5 = inlined_call_operand.vmem [shape: f32[8,32], index: 5, kind: input, shape index: {}]
  %s6 = inlined_call_operand.vmem [shape: f32[1,32], index: 6, kind: input, shape index: {}]
  %s7 = inlined_call_operand.vmem [shape: f32[32,32], index: 7, kind: input, shape index: {}]
  %s8 = inlined_call_operand.vmem [shape: f32[1,32], index: 8, kind: input, shape index: {}]
  %s9 = inlined_call_operand.vmem [shape: f32[32,16], index: 9, kind: input, shape index: {}]
  %s10 = inlined_call_operand.vmem [shape: f32[1,16], index: 10, kind: input, shape index: {}]
  %s11 = inlined_call_operand.vmem [shape: f32[1,16], index: 11, kind: input, shape index: {}]
  %s12 = inlined_call_operand.vmem [shape: f32[1,16], index: 12, kind: input, shape index: {}]
  %s13 = inlined_call_operand.vmem [shape: f32[256,16], index: 13, kind: output, shape index: {}]
  %s14 = sld [smem:[#allocation0]]
  $region85: #{tpu_custom_call.1} parent=0
    _
  %s16 = ssub.s32 1, %s14
  %s17 = scalar_select 0, %s16, %s14
  loop: start=0, step=1, limit=4
  $region2: #{tpu_custom_call.1} parent=0 // loop_pre_header
    _
  $region3: #{tpu_custom_call.1} parent=0 // loop_header
    %s19 = sphi 0, %s23
    %p20 = scmp.ge.s32.totalorder %s19, 4
    %s29 = sphi 0, %s31
    %s32 = sphi 0, %s29
    %s33 = sphi 0, %s32
    %s49 = sphi 0, %s33
    %s55 = sphi 0, %s57
    %s58 = sphi 0, %s55
    %s59 = sphi 0, %s58
    %s75 = sphi 0, %s59
    %s81 = sphi 0, %s83
    %s84 = sphi 0, %s81
    %s85 = sphi 0, %s84
    %s101 = sphi 0, %s85
    %s105 = sphi 0, %s105
    %s107 = sphi 0, %s105
    %s108 = sphi 0, %s107
    %s122 = sphi 0, %s108
    %s126 = sphi 0, %s126
    %s128 = sphi 0, %s126
    %s129 = sphi 0, %s128
    %s143 = sphi 0, %s129
    %s147 = sphi 0, %s147
    %s149 = sphi 0, %s147
    %s150 = sphi 0, %s149
    %s164 = sphi 0, %s150
    %s168 = sphi 0, %s168
    %s170 = sphi 0, %s168
    %s171 = sphi 0, %s170
    %s185 = sphi 0, %s171
    %s189 = sphi 0, %s189
    %s191 = sphi 0, %s189
    %s192 = sphi 0, %s191
    %s206 = sphi 0, %s192
    %s210 = sphi 0, %s210
    %s212 = sphi 0, %s210
    %s213 = sphi 0, %s212
    %s227 = sphi 0, %s213
    %s231 = sphi 0, %s231
    %s233 = sphi 0, %s231
    %s234 = sphi 0, %s233
    %s248 = sphi 0, %s234
    %s252 = sphi 0, %s252
    %s254 = sphi 0, %s252
    %s255 = sphi 0, %s254
    %s269 = sphi 0, %s255
    %s273 = sphi 0, %s273
    %s275 = sphi 0, %s273
    %s276 = sphi 0, %s275
    %s290 = sphi 0, %s276
    %s294 = sphi 0, %s294
    %s296 = sphi 0, %s294
    %s297 = sphi 0, %s296
    %s311 = sphi 0, %s297
    %s317 = sphi 0, %s319
    %s320 = sphi 0, %s317
    %s321 = sphi 0, %s320
    %s337 = sphi 0, %s321
  $region4: #{tpu_custom_call.1} parent=0 // loop_header_branch
    %22 = sbr.rel (%p20) target = $region8
  $region5: #{tpu_custom_call.1} parent=0 // loop_body
    %s24 = ssub.s32 %s19, 1
    %s25 = ssub.s32 %s19, 2
    %s26 = sadd.s32 %s19, 1
    %s27 = ssub.s32 %s19, %s26
    %p28 = scmp.eq.s32.totalorder %s27, 0
    %s30 = sadd.s32 %s29, 1
    %s31 = scalar_select %p28, %s29, %s30
    %p34 = pneg %p28
    %p35 = scmp.eq.s32.totalorder %s19, 1
    %p36 = por %p34, %p35
    %p37 = scmp.ne.s32.totalorder %s29, %s32
    %p38 = scmp.eq.s32.totalorder %s19, 0
    %p39 = por %p37, %p38
    %p40 = scmp.ne.s32.totalorder %s29, %s32
    %p41 = scmp.eq.s32.totalorder %s24, 1
    %p42 = por %p40, %p41
    %p43 = scmp.ne.s32.totalorder %s32, %s33
    %p44 = scmp.eq.s32.totalorder %s24, 0
    %p45 = por %p43, %p44
    %p46 = scmp.ne.s32.totalorder %s32, %s33
    %p47 = scmp.eq.s32.totalorder %s25, 1
    %p48 = por %p46, %p47
    %p50 = scmp.ne.s32.totalorder %s33, %s49
    %p51 = scmp.eq.s32.totalorder %s25, 0
    %p52 = por %p50, %p51
    %s53 = ssub.s32 %s19, %s26
    %p54 = scmp.eq.s32.totalorder %s53, 0
    %s56 = sadd.s32 %s55, 1
    %s57 = scalar_select %p54, %s55, %s56
    %p60 = pneg %p54
    %p61 = scmp.eq.s32.totalorder %s19, 1
    %p62 = por %p60, %p61
    %p63 = scmp.ne.s32.totalorder %s55, %s58
    %p64 = scmp.eq.s32.totalorder %s19, 0
    %p65 = por %p63, %p64
    %p66 = scmp.ne.s32.totalorder %s55, %s58
    %p67 = scmp.eq.s32.totalorder %s24, 1
    %p68 = por %p66, %p67
    %p69 = scmp.ne.s32.totalorder %s58, %s59
    %p70 = scmp.eq.s32.totalorder %s24, 0
    %p71 = por %p69, %p70
    %p72 = scmp.ne.s32.totalorder %s58, %s59
    %p73 = scmp.eq.s32.totalorder %s25, 1
    %p74 = por %p72, %p73
    %p76 = scmp.ne.s32.totalorder %s59, %s75
    %p77 = scmp.eq.s32.totalorder %s25, 0
    %p78 = por %p76, %p77
    %s79 = ssub.s32 %s19, %s26
    %p80 = scmp.eq.s32.totalorder %s79, 0
    %s82 = sadd.s32 %s81, 1
    %s83 = scalar_select %p80, %s81, %s82
    %p86 = pneg %p80
    %p87 = scmp.eq.s32.totalorder %s19, 1
    %p88 = por %p86, %p87
    %p89 = scmp.ne.s32.totalorder %s81, %s84
    %p90 = scmp.eq.s32.totalorder %s19, 0
    %p91 = por %p89, %p90
    %p92 = scmp.ne.s32.totalorder %s81, %s84
    %p93 = scmp.eq.s32.totalorder %s24, 1
    %p94 = por %p92, %p93
    %p95 = scmp.ne.s32.totalorder %s84, %s85
    %p96 = scmp.eq.s32.totalorder %s24, 0
    %p97 = por %p95, %p96
    %p98 = scmp.ne.s32.totalorder %s84, %s85
    %p99 = scmp.eq.s32.totalorder %s25, 1
    %p100 = por %p98, %p99
    %p102 = scmp.ne.s32.totalorder %s85, %s101
    %p103 = scmp.eq.s32.totalorder %s25, 0
    %p104 = por %p102, %p103
    %s106 = sadd.s32 %s105, 1
    %p109 = scmp.eq.s32.totalorder %s19, 1
    %p110 = scmp.ne.s32.totalorder %s105, %s107
    %p111 = scmp.eq.s32.totalorder %s19, 0
    %p112 = por %p110, %p111
    %p113 = scmp.ne.s32.totalorder %s105, %s107
    %p114 = scmp.eq.s32.totalorder %s24, 1
    %p115 = por %p113, %p114
    %p116 = scmp.ne.s32.totalorder %s107, %s108
    %p117 = scmp.eq.s32.totalorder %s24, 0
    %p118 = por %p116, %p117
    %p119 = scmp.ne.s32.totalorder %s107, %s108
    %p120 = scmp.eq.s32.totalorder %s25, 1
    %p121 = por %p119, %p120
    %p123 = scmp.ne.s32.totalorder %s108, %s122
    %p124 = scmp.eq.s32.totalorder %s25, 0
    %p125 = por %p123, %p124
    %s127 = sadd.s32 %s126, 1
    %p130 = scmp.eq.s32.totalorder %s19, 1
    %p131 = scmp.ne.s32.totalorder %s126, %s128
    %p132 = scmp.eq.s32.totalorder %s19, 0
    %p133 = por %p131, %p132
    %p134 = scmp.ne.s32.totalorder %s126, %s128
    %p135 = scmp.eq.s32.totalorder %s24, 1
    %p136 = por %p134, %p135
    %p137 = scmp.ne.s32.totalorder %s128, %s129
    %p138 = scmp.eq.s32.totalorder %s24, 0
    %p139 = por %p137, %p138
    %p140 = scmp.ne.s32.totalorder %s128, %s129
    %p141 = scmp.eq.s32.totalorder %s25, 1
    %p142 = por %p140, %p141
    %p144 = scmp.ne.s32.totalorder %s129, %s143
    %p145 = scmp.eq.s32.totalorder %s25, 0
    %p146 = por %p144, %p145
    %s148 = sadd.s32 %s147, 1
    %p151 = scmp.eq.s32.totalorder %s19, 1
    %p152 = scmp.ne.s32.totalorder %s147, %s149
    %p153 = scmp.eq.s32.totalorder %s19, 0
    %p154 = por %p152, %p153
    %p155 = scmp.ne.s32.totalorder %s147, %s149
    %p156 = scmp.eq.s32.totalorder %s24, 1
    %p157 = por %p155, %p156
    %p158 = scmp.ne.s32.totalorder %s149, %s150
    %p159 = scmp.eq.s32.totalorder %s24, 0
    %p160 = por %p158, %p159
    %p161 = scmp.ne.s32.totalorder %s149, %s150
    %p162 = scmp.eq.s32.totalorder %s25, 1
    %p163 = por %p161, %p162
    %p165 = scmp.ne.s32.totalorder %s150, %s164
    %p166 = scmp.eq.s32.totalorder %s25, 0
    %p167 = por %p165, %p166
    %s169 = sadd.s32 %s168, 1
    %p172 = scmp.eq.s32.totalorder %s19, 1
    %p173 = scmp.ne.s32.totalorder %s168, %s170
    %p174 = scmp.eq.s32.totalorder %s19, 0
    %p175 = por %p173, %p174
    %p176 = scmp.ne.s32.totalorder %s168, %s170
    %p177 = scmp.eq.s32.totalorder %s24, 1
    %p178 = por %p176, %p177
    %p179 = scmp.ne.s32.totalorder %s170, %s171
    %p180 = scmp.eq.s32.totalorder %s24, 0
    %p181 = por %p179, %p180
    %p182 = scmp.ne.s32.totalorder %s170, %s171
    %p183 = scmp.eq.s32.totalorder %s25, 1
    %p184 = por %p182, %p183
    %p186 = scmp.ne.s32.totalorder %s171, %s185
    %p187 = scmp.eq.s32.totalorder %s25, 0
    %p188 = por %p186, %p187
    %s190 = sadd.s32 %s189, 1
    %p193 = scmp.eq.s32.totalorder %s19, 1
    %p194 = scmp.ne.s32.totalorder %s189, %s191
    %p195 = scmp.eq.s32.totalorder %s19, 0
    %p196 = por %p194, %p195
    %p197 = scmp.ne.s32.totalorder %s189, %s191
    %p198 = scmp.eq.s32.totalorder %s24, 1
    %p199 = por %p197, %p198
    %p200 = scmp.ne.s32.totalorder %s191, %s192
    %p201 = scmp.eq.s32.totalorder %s24, 0
    %p202 = por %p200, %p201
    %p203 = scmp.ne.s32.totalorder %s191, %s192
    %p204 = scmp.eq.s32.totalorder %s25, 1
    %p205 = por %p203, %p204
    %p207 = scmp.ne.s32.totalorder %s192, %s206
    %p208 = scmp.eq.s32.totalorder %s25, 0
    %p209 = por %p207, %p208
    %s211 = sadd.s32 %s210, 1
    %p214 = scmp.eq.s32.totalorder %s19, 1
    %p215 = scmp.ne.s32.totalorder %s210, %s212
    %p216 = scmp.eq.s32.totalorder %s19, 0
    %p217 = por %p215, %p216
    %p218 = scmp.ne.s32.totalorder %s210, %s212
    %p219 = scmp.eq.s32.totalorder %s24, 1
    %p220 = por %p218, %p219
    %p221 = scmp.ne.s32.totalorder %s212, %s213
    %p222 = scmp.eq.s32.totalorder %s24, 0
    %p223 = por %p221, %p222
    %p224 = scmp.ne.s32.totalorder %s212, %s213
    %p225 = scmp.eq.s32.totalorder %s25, 1
    %p226 = por %p224, %p225
    %p228 = scmp.ne.s32.totalorder %s213, %s227
    %p229 = scmp.eq.s32.totalorder %s25, 0
    %p230 = por %p228, %p229
    %s232 = sadd.s32 %s231, 1
    %p235 = scmp.eq.s32.totalorder %s19, 1
    %p236 = scmp.ne.s32.totalorder %s231, %s233
    %p237 = scmp.eq.s32.totalorder %s19, 0
    %p238 = por %p236, %p237
    %p239 = scmp.ne.s32.totalorder %s231, %s233
    %p240 = scmp.eq.s32.totalorder %s24, 1
    %p241 = por %p239, %p240
    %p242 = scmp.ne.s32.totalorder %s233, %s234
    %p243 = scmp.eq.s32.totalorder %s24, 0
    %p244 = por %p242, %p243
    %p245 = scmp.ne.s32.totalorder %s233, %s234
    %p246 = scmp.eq.s32.totalorder %s25, 1
    %p247 = por %p245, %p246
    %p249 = scmp.ne.s32.totalorder %s234, %s248
    %p250 = scmp.eq.s32.totalorder %s25, 0
    %p251 = por %p249, %p250
    %s253 = sadd.s32 %s252, 1
    %p256 = scmp.eq.s32.totalorder %s19, 1
    %p257 = scmp.ne.s32.totalorder %s252, %s254
    %p258 = scmp.eq.s32.totalorder %s19, 0
    %p259 = por %p257, %p258
    %p260 = scmp.ne.s32.totalorder %s252, %s254
    %p261 = scmp.eq.s32.totalorder %s24, 1
    %p262 = por %p260, %p261
    %p263 = scmp.ne.s32.totalorder %s254, %s255
    %p264 = scmp.eq.s32.totalorder %s24, 0
    %p265 = por %p263, %p264
    %p266 = scmp.ne.s32.totalorder %s254, %s255
    %p267 = scmp.eq.s32.totalorder %s25, 1
    %p268 = por %p266, %p267
    %p270 = scmp.ne.s32.totalorder %s255, %s269
    %p271 = scmp.eq.s32.totalorder %s25, 0
    %p272 = por %p270, %p271
    %s274 = sadd.s32 %s273, 1
    %p277 = scmp.eq.s32.totalorder %s19, 1
    %p278 = scmp.ne.s32.totalorder %s273, %s275
    %p279 = scmp.eq.s32.totalorder %s19, 0
    %p280 = por %p278, %p279
    %p281 = scmp.ne.s32.totalorder %s273, %s275
    %p282 = scmp.eq.s32.totalorder %s24, 1
    %p283 = por %p281, %p282
    %p284 = scmp.ne.s32.totalorder %s275, %s276
    %p285 = scmp.eq.s32.totalorder %s24, 0
    %p286 = por %p284, %p285
    %p287 = scmp.ne.s32.totalorder %s275, %s276
    %p288 = scmp.eq.s32.totalorder %s25, 1
    %p289 = por %p287, %p288
    %p291 = scmp.ne.s32.totalorder %s276, %s290
    %p292 = scmp.eq.s32.totalorder %s25, 0
    %p293 = por %p291, %p292
    %s295 = sadd.s32 %s294, 1
    %p298 = scmp.eq.s32.totalorder %s19, 1
    %p299 = scmp.ne.s32.totalorder %s294, %s296
    %p300 = scmp.eq.s32.totalorder %s19, 0
    %p301 = por %p299, %p300
    %p302 = scmp.ne.s32.totalorder %s294, %s296
    %p303 = scmp.eq.s32.totalorder %s24, 1
    %p304 = por %p302, %p303
    %p305 = scmp.ne.s32.totalorder %s296, %s297
    %p306 = scmp.eq.s32.totalorder %s24, 0
    %p307 = por %p305, %p306
    %p308 = scmp.ne.s32.totalorder %s296, %s297
    %p309 = scmp.eq.s32.totalorder %s25, 1
    %p310 = por %p308, %p309
    %p312 = scmp.ne.s32.totalorder %s297, %s311
    %p313 = scmp.eq.s32.totalorder %s25, 0
    %p314 = por %p312, %p313
    %s315 = ssub.s32 %s19, %s26
    %p316 = scmp.eq.s32.totalorder %s315, 0
    %s318 = sadd.s32 %s317, 1
    %s319 = scalar_select %p316, %s317, %s318
    %p322 = pneg %p316
    %p323 = scmp.eq.s32.totalorder %s19, 1
    %p324 = por %p322, %p323
    %p325 = scmp.ne.s32.totalorder %s317, %s320
    %p326 = scmp.eq.s32.totalorder %s19, 0
    %p327 = por %p325, %p326
    %p328 = scmp.ne.s32.totalorder %s317, %s320
    %p329 = scmp.eq.s32.totalorder %s24, 1
    %p330 = por %p328, %p329
    %p331 = scmp.ne.s32.totalorder %s320, %s321
    %p332 = scmp.eq.s32.totalorder %s24, 0
    %p333 = por %p331, %p332
    %p334 = scmp.ne.s32.totalorder %s320, %s321
    %p335 = scmp.eq.s32.totalorder %s25, 1
    %p336 = por %p334, %p335
    %p338 = scmp.ne.s32.totalorder %s321, %s337
    %p339 = scmp.eq.s32.totalorder %s25, 0
    %p340 = por %p338, %p339
    %p341 = scmp.le.s32.totalorder 1, %s19
    %p342 = scmp.lt.s32.totalorder %s19, 3
    %p343 = pnand %p341, %p342
    %p344 = pneg %p343
    // Predicated region
    $region9: #{tpu_custom_call.1} parent=5 // pred_check
      _
    $region10: #{tpu_custom_call.1} parent=5 // pred_check_branch
      %346 = sbr.rel (%p343) target = $region12
    $region11: #{tpu_custom_call.1} parent=5 // pred_region
      %s347 = ssub.s32 %s19, 1
      // Predicated region
      $region13: #{tpu_custom_call.1} parent=11 // pred_check
        %p348 = pneg %p118
      $region14: #{tpu_custom_call.1} parent=11 // pred_check_branch
        %350 = sbr.rel (%p348) target = $region16
      $region15: #{tpu_custom_call.1} parent=11 // pred_region
        _
      $region16: #{tpu_custom_call.1} parent=11 // pred_fallthru
        _
      // Predicated region
      $region17: #{tpu_custom_call.1} parent=11 // pred_check
        %p351 = pneg %p139
      $region18: #{tpu_custom_call.1} parent=11 // pred_check_branch
        %353 = sbr.rel (%p351) target = $region20
      $region19: #{tpu_custom_call.1} parent=11 // pred_region
        _
      $region20: #{tpu_custom_call.1} parent=11 // pred_fallthru
        _
      // Predicated region
      $region21: #{tpu_custom_call.1} parent=11 // pred_check
        %p354 = pneg %p160
      $region22: #{tpu_custom_call.1} parent=11 // pred_check_branch
        %356 = sbr.rel (%p354) target = $region24
      $region23: #{tpu_custom_call.1} parent=11 // pred_region
        _
      $region24: #{tpu_custom_call.1} parent=11 // pred_fallthru
        _
      // Predicated region
      $region25: #{tpu_custom_call.1} parent=11 // pred_check
        %p357 = pneg %p181
      $region26: #{tpu_custom_call.1} parent=11 // pred_check_branch
        %359 = sbr.rel (%p357) target = $region28
      $region27: #{tpu_custom_call.1} parent=11 // pred_region
        _
      $region28: #{tpu_custom_call.1} parent=11 // pred_fallthru
        _
      // Predicated region
      $region29: #{tpu_custom_call.1} parent=11 // pred_check
        %p360 = pneg %p202
      $region30: #{tpu_custom_call.1} parent=11 // pred_check_branch
        %362 = sbr.rel (%p360) target = $region32
      $region31: #{tpu_custom_call.1} parent=11 // pred_region
        _
      $region32: #{tpu_custom_call.1} parent=11 // pred_fallthru
        _
      // Predicated region
      $region33: #{tpu_custom_call.1} parent=11 // pred_check
        %p363 = pneg %p223
      $region34: #{tpu_custom_call.1} parent=11 // pred_check_branch
        %365 = sbr.rel (%p363) target = $region36
      $region35: #{tpu_custom_call.1} parent=11 // pred_region
        _
      $region36: #{tpu_custom_call.1} parent=11 // pred_fallthru
        _
      // Predicated region
      $region37: #{tpu_custom_call.1} parent=11 // pred_check
        %p366 = pneg %p244
      $region38: #{tpu_custom_call.1} parent=11 // pred_check_branch
        %368 = sbr.rel (%p366) target = $region40
      $region39: #{tpu_custom_call.1} parent=11 // pred_region
        _
      $region40: #{tpu_custom_call.1} parent=11 // pred_fallthru
        _
      // Predicated region
      $region41: #{tpu_custom_call.1} parent=11 // pred_check
        %p369 = pneg %p265
      $region42: #{tpu_custom_call.1} parent=11 // pred_check_branch
        %371 = sbr.rel (%p369) target = $region44
      $region43: #{tpu_custom_call.1} parent=11 // pred_region
        _
      $region44: #{tpu_custom_call.1} parent=11 // pred_fallthru
        _
      // Predicated region
      $region45: #{tpu_custom_call.1} parent=11 // pred_check
        %p372 = pneg %p286
      $region46: #{tpu_custom_call.1} parent=11 // pred_check_branch
        %374 = sbr.rel (%p372) target = $region48
      $region47: #{tpu_custom_call.1} parent=11 // pred_region
        _
      $region48: #{tpu_custom_call.1} parent=11 // pred_fallthru
        _
      // Predicated region
      $region49: #{tpu_custom_call.1} parent=11 // pred_check
        %p375 = pneg %p307
      $region50: #{tpu_custom_call.1} parent=11 // pred_check_branch
        %377 = sbr.rel (%p375) target = $region52
      $region51: #{tpu_custom_call.1} parent=11 // pred_region
        _
      $region52: #{tpu_custom_call.1} parent=11 // pred_fallthru
        _
    $region12: #{tpu_custom_call.1} parent=5 // pred_fallthru
      _
    %p378 = scmp.lt.s32.totalorder %s19, 2
    // Predicated region
    $region53: #{tpu_custom_call.1} parent=5 // pred_check
      %p379 = pneg %p378
    $region54: #{tpu_custom_call.1} parent=5 // pred_check_branch
      %381 = sbr.rel (%p379) target = $region56
    $region55: #{tpu_custom_call.1} parent=5 // pred_region
      // Predicated region
      $region57: #{tpu_custom_call.1} parent=55 // pred_check
        %p382 = pneg %p39
      $region58: #{tpu_custom_call.1} parent=55 // pred_check_branch
        %384 = sbr.rel (%p382) target = $region60
      $region59: #{tpu_custom_call.1} parent=55 // pred_region
        %s385 = smul.u32 16, %s19
        %p386 = scmp.lt.s32.totalorder %s385, 31
        %s387 = scalar_select %p386, %s385, 31
        %s388 = smul.addr %s387, 8
        %s389 = scalar_lea.vmem %s0, %s388
        %s390 = smul.u32 16, %s19
      $region60: #{tpu_custom_call.1} parent=55 // pred_fallthru
        _
      // Predicated region
      $region61: #{tpu_custom_call.1} parent=55 // pred_check
        %p391 = pneg %p65
      $region62: #{tpu_custom_call.1} parent=55 // pred_check_branch
        %393 = sbr.rel (%p391) target = $region64
      $region63: #{tpu_custom_call.1} parent=55 // pred_region
        %s394 = smul.u32 16, %s19
        %p395 = scmp.lt.s32.totalorder %s394, 31
        %s396 = scalar_select %p395, %s394, 31
        %s397 = smul.addr %s396, 8
        %s398 = scalar_lea.vmem %s1, %s397
        %s399 = smul.u32 16, %s19
      $region64: #{tpu_custom_call.1} parent=55 // pred_fallthru
        _
      // Predicated region
      $region65: #{tpu_custom_call.1} parent=55 // pred_check
        %p400 = pneg %p91
      $region66: #{tpu_custom_call.1} parent=55 // pred_check_branch
        %402 = sbr.rel (%p400) target = $region68
      $region67: #{tpu_custom_call.1} parent=55 // pred_region
        %s403 = smul.u32 16, %s19
        %p404 = scmp.lt.s32.totalorder %s403, 31
        %s405 = scalar_select %p404, %s403, 31
        %s406 = smul.addr %s405, 8
        %s407 = scalar_lea.vmem %s2, %s406
        %s408 = smul.u32 16, %s19
      $region68: #{tpu_custom_call.1} parent=55 // pred_fallthru
        _
    $region56: #{tpu_custom_call.1} parent=5 // pred_fallthru
      _
    %p409 = scmp.le.s32.totalorder 1, %s19
    %p410 = scmp.lt.s32.totalorder %s19, 3
    %p411 = pnand %p409, %p410
    %p412 = pneg %p411
    // Predicated region
    $region69: #{tpu_custom_call.1} parent=5 // pred_check
      _
    $region70: #{tpu_custom_call.1} parent=5 // pred_check_branch
      %414 = sbr.rel (%p411) target = $region72
    $region71: #{tpu_custom_call.1} parent=5 // pred_region
      %s415 = ssub.s32 %s19, 1
      %s416 = smul.u32 16, %s24
      %p417 = scmp.lt.s32.totalorder %s416, 31
      %s418 = scalar_select %p417, %s416, 31
      %s419 = smul.addr %s418, 8
      %s420 = scalar_lea.vmem %s0, %s419
      %p421 = pneg %p45
      %p422 = pneg %p42
      %s423 = smul.u32 16, %s24
      %p424 = scmp.lt.s32.totalorder %s423, 31
      %s425 = scalar_select %p424, %s423, 31
      %s426 = smul.addr %s425, 8
      %s427 = scalar_lea.vmem %s1, %s426
      %p428 = pneg %p71
      %p429 = pneg %p68
      %s430 = smul.u32 16, %s24
      %p431 = scmp.lt.s32.totalorder %s430, 31
      %s432 = scalar_select %p431, %s430, 31
      %s433 = smul.addr %s432, 8
      %s434 = scalar_lea.vmem %s2, %s433
      %p435 = pneg %p97
      %p436 = pneg %p94
      %p437 = pneg %p118
      %p438 = pneg %p115
      %p439 = pneg %p139
      %p440 = pneg %p136
      %p441 = pneg %p160
      %p442 = pneg %p157
      %p443 = pneg %p181
      %p444 = pneg %p178
      %p445 = pneg %p202
      %p446 = pneg %p199
      %p447 = pneg %p223
      %p448 = pneg %p220
      %p449 = pneg %p244
      %p450 = pneg %p241
      %p451 = pneg %p265
      %p452 = pneg %p262
      %p453 = pneg %p286
      %p454 = pneg %p283
      %p455 = pneg %p307
      %p456 = pneg %p304
      %p457 = pneg %p333
      %p458 = pneg %p330
      %s459 = smul.u32 16, %s24
      %p460 = scmp.lt.s32.totalorder %s459, 31
      %s461 = scalar_select %p460, %s459, 31
      %s462 = smul.addr %s461, 8
      %s463 = scalar_lea.vmem %s13, %s462
      %s464 = smul.u32 16, %s24
      %p465 = scmp.lt.s32.totalorder %s464, 31
      %s466 = scalar_select %p465, %s464, 31
      %s467 = smul.addr %s466, 8
      %s468 = scalar_lea.vmem %s0, %s467
      %s469 = smul.u32 16, %s24
      %s470 = smul.u32 16, %s24
      %p471 = scmp.lt.s32.totalorder %s470, 31
      %s472 = scalar_select %p471, %s470, 31
      %s473 = smul.addr %s472, 8
      %s474 = scalar_lea.vmem %s1, %s473
      %s475 = smul.u32 16, %s24
      %s476 = smul.u32 16, %s24
      %p477 = scmp.lt.s32.totalorder %s476, 31
      %s478 = scalar_select %p477, %s476, 31
      %s479 = smul.addr %s478, 8
      %s480 = scalar_lea.vmem %s2, %s479
      %s481 = smul.u32 16, %s24
      %s482 = smul.u32 16, %s24
      %p483 = scmp.lt.s32.totalorder %s482, 31
      %s484 = scalar_select %p483, %s482, 31
      %s485 = smul.addr %s484, 8
      %s486 = scalar_lea.vmem %s13, %s485
      %s487 = smul.u32 16, %s24
      %v488 = vld [vmem:[%s11] sm:$0x1]
      %v489 = vld [vmem:[%s12] sm:$0x1]
      %v490 = vld [vmem:[%s468] sm:$0xff]
      %v491 = vld [vmem:[%s468 + $0x8] sm:$0xff]
      %v492 = vld [vmem:[%s468 + $0x10] sm:$0xff]
      %v493 = vld [vmem:[%s468 + $0x18] sm:$0xff]
      %v494 = vld [vmem:[%s468 + $0x20] sm:$0xff]
      %v495 = vld [vmem:[%s468 + $0x28] sm:$0xff]
      %v496 = vld [vmem:[%s468 + $0x30] sm:$0xff]
      %v497 = vld [vmem:[%s468 + $0x38] sm:$0xff]
      %v498 = vld [vmem:[%s468 + $0x40] sm:$0xff]
      %v499 = vld [vmem:[%s468 + $0x48] sm:$0xff]
      %v500 = vld [vmem:[%s468 + $0x50] sm:$0xff]
      %v501 = vld [vmem:[%s468 + $0x58] sm:$0xff]
      %v502 = vld [vmem:[%s468 + $0x60] sm:$0xff]
      %v503 = vld [vmem:[%s468 + $0x68] sm:$0xff]
      %v504 = vld [vmem:[%s468 + $0x70] sm:$0xff]
      %v505 = vld [vmem:[%s468 + $0x78] sm:$0xff]
      %v506 = vld [vmem:[%s3] sm:$0xff]
      %v507 = vld [vmem:[%s3 + $0x8] sm:$0xff]
      %v508 = vld [vmem:[%s474] sm:$0xff]
      %v509 = vld [vmem:[%s474 + $0x8] sm:$0xff]
      %v510 = vld [vmem:[%s474 + $0x10] sm:$0xff]
      %v511 = vld [vmem:[%s474 + $0x18] sm:$0xff]
      %v512 = vld [vmem:[%s474 + $0x20] sm:$0xff]
      %v513 = vld [vmem:[%s474 + $0x28] sm:$0xff]
      %v514 = vld [vmem:[%s474 + $0x30] sm:$0xff]
      %v515 = vld [vmem:[%s474 + $0x38] sm:$0xff]
      %v516 = vld [vmem:[%s474 + $0x40] sm:$0xff]
      %v517 = vld [vmem:[%s474 + $0x48] sm:$0xff]
      %v518 = vld [vmem:[%s474 + $0x50] sm:$0xff]
      %v519 = vld [vmem:[%s474 + $0x58] sm:$0xff]
      %v520 = vld [vmem:[%s474 + $0x60] sm:$0xff]
      %v521 = vld [vmem:[%s474 + $0x68] sm:$0xff]
      %v522 = vld [vmem:[%s474 + $0x70] sm:$0xff]
      %v523 = vld [vmem:[%s474 + $0x78] sm:$0xff]
      %v524 = vld [vmem:[%s4] sm:$0xff]
      %v525 = vld [vmem:[%s4 + $0x8] sm:$0xff]
      %vm526 = vcmask 130048
      %v528 = vsel %vm526, %v508, 0
      %v531 = vsel %vm526, %v509, 0
      %v534 = vsel %vm526, %v510, 0
      %v537 = vsel %vm526, %v511, 0
      %v540 = vsel %vm526, %v512, 0
      %v543 = vsel %vm526, %v513, 0
      %v546 = vsel %vm526, %v514, 0
      %v549 = vsel %vm526, %v515, 0
      %v552 = vsel %vm526, %v516, 0
      %v555 = vsel %vm526, %v517, 0
      %v558 = vsel %vm526, %v518, 0
      %v561 = vsel %vm526, %v519, 0
      %v564 = vsel %vm526, %v520, 0
      %v567 = vsel %vm526, %v521, 0
      %v570 = vsel %vm526, %v522, 0
      %v573 = vsel %vm526, %v523, 0
      %575 = vmatprep.subr.mxu0 0.0
      %576 = vmatpush1.msra.mxu0 0.0
      %577 = vmatprep.subr.mxu0 0.0
      %578 = vmatpush1.msra.mxu0 0.0
      %579 = vmatprep.subr.mxu0 0.0
      %580 = vmatpush1.msra.mxu0 0.0
      %581 = vmatprep.subr.mxu0 0.0
      %582 = vmatpush1.msra.mxu0 0.0
      %583 = vmatprep.subr.mxu0 0.0
      %584 = vmatpush1.msra.mxu0 0.0
      %585 = vmatprep.subr.mxu0 0.0
      %586 = vmatpush1.msra.mxu0 0.0
      %587 = vmatprep.subr.mxu0 0.0
      %588 = vmatpush1.msra.mxu0 0.0
      %589 = vmatprep.subr.mxu0 0.0
      %590 = vmatpush1.msra.mxu0 0.0
      %591 = vmatprep.subr.mxu0 0.0
      %592 = vmatpush1.msra.mxu0 0.0
      %593 = vmatprep.subr.mxu0 0.0
      %594 = vmatpush1.msra.mxu0 0.0
      %595 = vmatprep.subr.mxu0 0.0
      %596 = vmatpush1.msra.mxu0 0.0
      %597 = vmatprep.subr.mxu0 0.0
      %598 = vmatpush1.msra.mxu0 0.0
      %599 = vmatprep.subr.mxu0 0.0
      %600 = vmatpush1.msra.mxu0 0.0
      %601 = vmatprep.subr.mxu0 0.0
      %602 = vmatpush1.msra.mxu0 0.0
      %603 = vmatprep.subr.mxu0 0.0
      %604 = vmatpush1.msra.mxu0 %v525
      %605 = vmatprep.subr.mxu0 0.0
      %606 = vmatpush1.msra.mxu0 %v524
      %607 = vmatprep.subr.mxu0 0.0
      %608 = vmatpush2.msra.mxu0 0.0
      %609 = vmatprep.subr.mxu0 0.0
      %610 = vmatpush2.msra.mxu0 0.0
      %611 = vmatprep.subr.mxu0 0.0
      %612 = vmatpush2.msra.mxu0 0.0
      %613 = vmatprep.subr.mxu0 0.0
      %614 = vmatpush2.msra.mxu0 0.0
      %615 = vmatprep.subr.mxu0 0.0
      %616 = vmatpush2.msra.mxu0 0.0
      %617 = vmatprep.subr.mxu0 0.0
      %618 = vmatpush2.msra.mxu0 0.0
      %619 = vmatprep.subr.mxu0 0.0
      %620 = vmatpush2.msra.mxu0 0.0
      %621 = vmatprep.subr.mxu0 0.0
      %622 = vmatpush2.msra.mxu0 0.0
      %623 = vmatprep.subr.mxu0 0.0
      %624 = vmatpush2.msra.mxu0 0.0
      %625 = vmatprep.subr.mxu0 0.0
      %626 = vmatpush2.msra.mxu0 0.0
      %627 = vmatprep.subr.mxu0 0.0
      %628 = vmatpush2.msra.mxu0 0.0
      %629 = vmatprep.subr.mxu0 0.0
      %630 = vmatpush2.msra.mxu0 0.0
      %631 = vmatprep.subr.mxu0 0.0
      %632 = vmatpush2.msra.mxu0 0.0
      %633 = vmatprep.subr.mxu0 0.0
      %634 = vmatpush2.msra.mxu0 0.0
      %635 = vmatprep.subr.mxu0 0.0
      %636 = vmatpush2.msra.mxu0 0.0
      %637 = vmatprep.subr.mxu0 0.0
      %638 = vmatpush2.msra.mxu0 0.0
      %639 = vmatprep.mubr.f32.mxu0 0.0
      %640 = vmatmul.mubr.f32.gmra.mxu0 %v528
      %v641 = vpop.f32.mrf.mxu0
      %v642 = vadd.f32 0.0, %v641
      %v643 = vpop.f32.mrf.mxu0
      %644 = vmatprep.mubr.f32.mxu0 0.0
      %645 = vmatmul.mubr.f32.gmra.mxu0 %v531
      %v646 = vpop.f32.mrf.mxu0
      %v647 = vadd.f32 0.0, %v646
      %v648 = vpop.f32.mrf.mxu0
      %649 = vmatprep.mubr.f32.mxu0 0.0
      %650 = vmatmul.mubr.f32.gmra.mxu0 %v534
      %v651 = vpop.f32.mrf.mxu0
      %v652 = vadd.f32 0.0, %v651
      %v653 = vpop.f32.mrf.mxu0
      %654 = vmatprep.mubr.f32.mxu0 0.0
      %655 = vmatmul.mubr.f32.gmra.mxu0 %v537
      %v656 = vpop.f32.mrf.mxu0
      %v657 = vadd.f32 0.0, %v656
      %v658 = vpop.f32.mrf.mxu0
      %659 = vmatprep.mubr.f32.mxu0 0.0
      %660 = vmatmul.mubr.f32.gmra.mxu0 %v540
      %v661 = vpop.f32.mrf.mxu0
      %v662 = vadd.f32 0.0, %v661
      %v663 = vpop.f32.mrf.mxu0
      %664 = vmatprep.mubr.f32.mxu0 0.0
      %665 = vmatmul.mubr.f32.gmra.mxu0 %v543
      %v666 = vpop.f32.mrf.mxu0
      %v667 = vadd.f32 0.0, %v666
      %v668 = vpop.f32.mrf.mxu0
      %669 = vmatprep.mubr.f32.mxu0 0.0
      %670 = vmatmul.mubr.f32.gmra.mxu0 %v546
      %v671 = vpop.f32.mrf.mxu0
      %v672 = vadd.f32 0.0, %v671
      %v673 = vpop.f32.mrf.mxu0
      %674 = vmatprep.mubr.f32.mxu0 0.0
      %675 = vmatmul.mubr.f32.gmra.mxu0 %v549
      %v676 = vpop.f32.mrf.mxu0
      %v677 = vadd.f32 0.0, %v676
      %v678 = vpop.f32.mrf.mxu0
      %679 = vmatprep.mubr.f32.mxu0 0.0
      %680 = vmatmul.mubr.f32.gmra.mxu0 %v552
      %v681 = vpop.f32.mrf.mxu0
      %v682 = vadd.f32 0.0, %v681
      %v683 = vpop.f32.mrf.mxu0
      %684 = vmatprep.mubr.f32.mxu0 0.0
      %685 = vmatmul.mubr.f32.gmra.mxu0 %v555
      %v686 = vpop.f32.mrf.mxu0
      %v687 = vadd.f32 0.0, %v686
      %v688 = vpop.f32.mrf.mxu0
      %689 = vmatprep.mubr.f32.mxu0 0.0
      %690 = vmatmul.mubr.f32.gmra.mxu0 %v558
      %v691 = vpop.f32.mrf.mxu0
      %v692 = vadd.f32 0.0, %v691
      %v693 = vpop.f32.mrf.mxu0
      %694 = vmatprep.mubr.f32.mxu0 0.0
      %695 = vmatmul.mubr.f32.gmra.mxu0 %v561
      %v696 = vpop.f32.mrf.mxu0
      %v697 = vadd.f32 0.0, %v696
      %v698 = vpop.f32.mrf.mxu0
      %699 = vmatprep.mubr.f32.mxu0 0.0
      %700 = vmatmul.mubr.f32.gmra.mxu0 %v564
      %v701 = vpop.f32.mrf.mxu0
      %v702 = vadd.f32 0.0, %v701
      %v703 = vpop.f32.mrf.mxu0
      %704 = vmatprep.mubr.f32.mxu0 0.0
      %705 = vmatmul.mubr.f32.gmra.mxu0 %v567
      %v706 = vpop.f32.mrf.mxu0
      %v707 = vadd.f32 0.0, %v706
      %v708 = vpop.f32.mrf.mxu0
      %709 = vmatprep.mubr.f32.mxu0 0.0
      %710 = vmatmul.mubr.f32.gmra.mxu0 %v570
      %v711 = vpop.f32.mrf.mxu0
      %v712 = vadd.f32 0.0, %v711
      %v713 = vpop.f32.mrf.mxu0
      %714 = vmatprep.mubr.f32.mxu0 0.0
      %715 = vmatmul.mubr.f32.gmra.mxu0 %v573
      %v716 = vpop.f32.mrf.mxu0
      %v717 = vadd.f32 0.0, %v716
      %v718 = vpop.f32.mrf.mxu0
      %719 = vdwg.mxu0
      %v721 = vsel %vm526, %v490, 0
      %v724 = vsel %vm526, %v491, 0
      %v727 = vsel %vm526, %v492, 0
      %v730 = vsel %vm526, %v493, 0
      %v733 = vsel %vm526, %v494, 0
      %v736 = vsel %vm526, %v495, 0
      %v739 = vsel %vm526, %v496, 0
      %v742 = vsel %vm526, %v497, 0
      %v745 = vsel %vm526, %v498, 0
      %v748 = vsel %vm526, %v499, 0
      %v751 = vsel %vm526, %v500, 0
      %v754 = vsel %vm526, %v501, 0
      %v757 = vsel %vm526, %v502, 0
      %v760 = vsel %vm526, %v503, 0
      %v763 = vsel %vm526, %v504, 0
      %v766 = vsel %vm526, %v505, 0
      %768 = vmatprep.subr.mxu0 0.0
      %769 = vmatpush1.msra.mxu0 0.0
      %770 = vmatprep.subr.mxu0 0.0
      %771 = vmatpush1.msra.mxu0 0.0
      %772 = vmatprep.subr.mxu0 0.0
      %773 = vmatpush1.msra.mxu0 0.0
      %774 = vmatprep.subr.mxu0 0.0
      %775 = vmatpush1.msra.mxu0 0.0
      %776 = vmatprep.subr.mxu0 0.0
      %777 = vmatpush1.msra.mxu0 0.0
      %778 = vmatprep.subr.mxu0 0.0
      %779 = vmatpush1.msra.mxu0 0.0
      %780 = vmatprep.subr.mxu0 0.0
      %781 = vmatpush1.msra.mxu0 0.0
      %782 = vmatprep.subr.mxu0 0.0
      %783 = vmatpush1.msra.mxu0 0.0
      %784 = vmatprep.subr.mxu0 0.0
      %785 = vmatpush1.msra.mxu0 0.0
      %786 = vmatprep.subr.mxu0 0.0
      %787 = vmatpush1.msra.mxu0 0.0
      %788 = vmatprep.subr.mxu0 0.0
      %789 = vmatpush1.msra.mxu0 0.0
      %790 = vmatprep.subr.mxu0 0.0
      %791 = vmatpush1.msra.mxu0 0.0
      %792 = vmatprep.subr.mxu0 0.0
      %793 = vmatpush1.msra.mxu0 0.0
      %794 = vmatprep.subr.mxu0 0.0
      %795 = vmatpush1.msra.mxu0 0.0
      %796 = vmatprep.subr.mxu0 0.0
      %797 = vmatpush1.msra.mxu0 %v507
      %798 = vmatprep.subr.mxu0 0.0
      %799 = vmatpush1.msra.mxu0 %v506
      %800 = vmatprep.subr.mxu0 0.0
      %801 = vmatpush2.msra.mxu0 0.0
      %802 = vmatprep.subr.mxu0 0.0
      %803 = vmatpush2.msra.mxu0 0.0
      %804 = vmatprep.subr.mxu0 0.0
      %805 = vmatpush2.msra.mxu0 0.0
      %806 = vmatprep.subr.mxu0 0.0
      %807 = vmatpush2.msra.mxu0 0.0
      %808 = vmatprep.subr.mxu0 0.0
      %809 = vmatpush2.msra.mxu0 0.0
      %810 = vmatprep.subr.mxu0 0.0
      %811 = vmatpush2.msra.mxu0 0.0
      %812 = vmatprep.subr.mxu0 0.0
      %813 = vmatpush2.msra.mxu0 0.0
      %814 = vmatprep.subr.mxu0 0.0
      %815 = vmatpush2.msra.mxu0 0.0
      %816 = vmatprep.subr.mxu0 0.0
      %817 = vmatpush2.msra.mxu0 0.0
      %818 = vmatprep.subr.mxu0 0.0
      %819 = vmatpush2.msra.mxu0 0.0
      %820 = vmatprep.subr.mxu0 0.0
      %821 = vmatpush2.msra.mxu0 0.0
      %822 = vmatprep.subr.mxu0 0.0
      %823 = vmatpush2.msra.mxu0 0.0
      %824 = vmatprep.subr.mxu0 0.0
      %825 = vmatpush2.msra.mxu0 0.0
      %826 = vmatprep.subr.mxu0 0.0
      %827 = vmatpush2.msra.mxu0 0.0
      %828 = vmatprep.subr.mxu0 0.0
      %829 = vmatpush2.msra.mxu0 0.0
      %830 = vmatprep.subr.mxu0 0.0
      %831 = vmatpush2.msra.mxu0 0.0
      %832 = vmatprep.mubr.f32.mxu0 0.0
      %833 = vmatmul.mubr.f32.gmra.mxu0 %v721
      %v834 = vpop.f32.mrf.mxu0
      %v835 = vadd.f32 %v642, %v834
      %v836 = vpop.f32.mrf.mxu0
      %837 = vmatprep.mubr.f32.mxu0 0.0
      %838 = vmatmul.mubr.f32.gmra.mxu0 %v724
      %v839 = vpop.f32.mrf.mxu0
      %v840 = vadd.f32 %v647, %v839
      %v841 = vpop.f32.mrf.mxu0
      %842 = vmatprep.mubr.f32.mxu0 0.0
      %843 = vmatmul.mubr.f32.gmra.mxu0 %v727
      %v844 = vpop.f32.mrf.mxu0
      %v845 = vadd.f32 %v652, %v844
      %v846 = vpop.f32.mrf.mxu0
      %847 = vmatprep.mubr.f32.mxu0 0.0
      %848 = vmatmul.mubr.f32.gmra.mxu0 %v730
      %v849 = vpop.f32.mrf.mxu0
      %v850 = vadd.f32 %v657, %v849
      %v851 = vpop.f32.mrf.mxu0
      %852 = vmatprep.mubr.f32.mxu0 0.0
      %853 = vmatmul.mubr.f32.gmra.mxu0 %v733
      %v854 = vpop.f32.mrf.mxu0
      %v855 = vadd.f32 %v662, %v854
      %v856 = vpop.f32.mrf.mxu0
      %857 = vmatprep.mubr.f32.mxu0 0.0
      %858 = vmatmul.mubr.f32.gmra.mxu0 %v736
      %v859 = vpop.f32.mrf.mxu0
      %v860 = vadd.f32 %v667, %v859
      %v861 = vpop.f32.mrf.mxu0
      %862 = vmatprep.mubr.f32.mxu0 0.0
      %863 = vmatmul.mubr.f32.gmra.mxu0 %v739
      %v864 = vpop.f32.mrf.mxu0
      %v865 = vadd.f32 %v672, %v864
      %v866 = vpop.f32.mrf.mxu0
      %867 = vmatprep.mubr.f32.mxu0 0.0
      %868 = vmatmul.mubr.f32.gmra.mxu0 %v742
      %v869 = vpop.f32.mrf.mxu0
      %v870 = vadd.f32 %v677, %v869
      %v871 = vpop.f32.mrf.mxu0
      %872 = vmatprep.mubr.f32.mxu0 0.0
      %873 = vmatmul.mubr.f32.gmra.mxu0 %v745
      %v874 = vpop.f32.mrf.mxu0
      %v875 = vadd.f32 %v682, %v874
      %v876 = vpop.f32.mrf.mxu0
      %877 = vmatprep.mubr.f32.mxu0 0.0
      %878 = vmatmul.mubr.f32.gmra.mxu0 %v748
      %v879 = vpop.f32.mrf.mxu0
      %v880 = vadd.f32 %v687, %v879
      %v881 = vpop.f32.mrf.mxu0
      %882 = vmatprep.mubr.f32.mxu0 0.0
      %883 = vmatmul.mubr.f32.gmra.mxu0 %v751
      %v884 = vpop.f32.mrf.mxu0
      %v885 = vadd.f32 %v692, %v884
      %v886 = vpop.f32.mrf.mxu0
      %887 = vmatprep.mubr.f32.mxu0 0.0
      %888 = vmatmul.mubr.f32.gmra.mxu0 %v754
      %v889 = vpop.f32.mrf.mxu0
      %v890 = vadd.f32 %v697, %v889
      %v891 = vpop.f32.mrf.mxu0
      %892 = vmatprep.mubr.f32.mxu0 0.0
      %893 = vmatmul.mubr.f32.gmra.mxu0 %v757
      %v894 = vpop.f32.mrf.mxu0
      %v895 = vadd.f32 %v702, %v894
      %v896 = vpop.f32.mrf.mxu0
      %897 = vmatprep.mubr.f32.mxu0 0.0
      %898 = vmatmul.mubr.f32.gmra.mxu0 %v760
      %v899 = vpop.f32.mrf.mxu0
      %v900 = vadd.f32 %v707, %v899
      %v901 = vpop.f32.mrf.mxu0
      %902 = vmatprep.mubr.f32.mxu0 0.0
      %903 = vmatmul.mubr.f32.gmra.mxu0 %v763
      %v904 = vpop.f32.mrf.mxu0
      %v905 = vadd.f32 %v712, %v904
      %v906 = vpop.f32.mrf.mxu0
      %907 = vmatprep.mubr.f32.mxu0 0.0
      %908 = vmatmul.mubr.f32.gmra.mxu0 %v766
      %v909 = vpop.f32.mrf.mxu0
      %v910 = vadd.f32 %v717, %v909
      %v911 = vpop.f32.mrf.mxu0
      %912 = vdwg.mxu0
      %v913 = vld [vmem:[%s480] sm:$0xff]
      %v914 = vld [vmem:[%s480 + $0x8] sm:$0xff]
      %v915 = vld [vmem:[%s480 + $0x10] sm:$0xff]
      %v916 = vld [vmem:[%s480 + $0x18] sm:$0xff]
      %v917 = vld [vmem:[%s480 + $0x20] sm:$0xff]
      %v918 = vld [vmem:[%s480 + $0x28] sm:$0xff]
      %v919 = vld [vmem:[%s480 + $0x30] sm:$0xff]
      %v920 = vld [vmem:[%s480 + $0x38] sm:$0xff]
      %v921 = vld [vmem:[%s480 + $0x40] sm:$0xff]
      %v922 = vld [vmem:[%s480 + $0x48] sm:$0xff]
      %v923 = vld [vmem:[%s480 + $0x50] sm:$0xff]
      %v924 = vld [vmem:[%s480 + $0x58] sm:$0xff]
      %v925 = vld [vmem:[%s480 + $0x60] sm:$0xff]
      %v926 = vld [vmem:[%s480 + $0x68] sm:$0xff]
      %v927 = vld [vmem:[%s480 + $0x70] sm:$0xff]
      %v928 = vld [vmem:[%s480 + $0x78] sm:$0xff]
      %v929 = vld [vmem:[%s5] sm:$0xff]
      %vm930 = vcmask 64512
      %v932 = vsel %vm930, %v913, 0
      %v935 = vsel %vm930, %v914, 0
      %v938 = vsel %vm930, %v915, 0
      %v941 = vsel %vm930, %v916, 0
      %v944 = vsel %vm930, %v917, 0
      %v947 = vsel %vm930, %v918, 0
      %v950 = vsel %vm930, %v919, 0
      %v953 = vsel %vm930, %v920, 0
      %v956 = vsel %vm930, %v921, 0
      %v959 = vsel %vm930, %v922, 0
      %v962 = vsel %vm930, %v923, 0
      %v965 = vsel %vm930, %v924, 0
      %v968 = vsel %vm930, %v925, 0
      %v971 = vsel %vm930, %v926, 0
      %v974 = vsel %vm930, %v927, 0
      %v977 = vsel %vm930, %v928, 0
      %979 = vmatprep.subr.mxu0 0.0
      %980 = vmatpush1.msra.mxu0 0.0
      %981 = vmatprep.subr.mxu0 0.0
      %982 = vmatpush1.msra.mxu0 0.0
      %983 = vmatprep.subr.mxu0 0.0
      %984 = vmatpush1.msra.mxu0 0.0
      %985 = vmatprep.subr.mxu0 0.0
      %986 = vmatpush1.msra.mxu0 0.0
      %987 = vmatprep.subr.mxu0 0.0
      %988 = vmatpush1.msra.mxu0 0.0
      %989 = vmatprep.subr.mxu0 0.0
      %990 = vmatpush1.msra.mxu0 0.0
      %991 = vmatprep.subr.mxu0 0.0
      %992 = vmatpush1.msra.mxu0 0.0
      %993 = vmatprep.subr.mxu0 0.0
      %994 = vmatpush1.msra.mxu0 0.0
      %995 = vmatprep.subr.mxu0 0.0
      %996 = vmatpush1.msra.mxu0 0.0
      %997 = vmatprep.subr.mxu0 0.0
      %998 = vmatpush1.msra.mxu0 0.0
      %999 = vmatprep.subr.mxu0 0.0
      %1000 = vmatpush1.msra.mxu0 0.0
      %1001 = vmatprep.subr.mxu0 0.0
      %1002 = vmatpush1.msra.mxu0 0.0
      %1003 = vmatprep.subr.mxu0 0.0
      %1004 = vmatpush1.msra.mxu0 0.0
      %1005 = vmatprep.subr.mxu0 0.0
      %1006 = vmatpush1.msra.mxu0 0.0
      %1007 = vmatprep.subr.mxu0 0.0
      %1008 = vmatpush1.msra.mxu0 0.0
      %1009 = vmatprep.subr.mxu0 0.0
      %1010 = vmatpush1.msra.mxu0 %v929
      %1011 = vmatprep.subr.mxu0 0.0
      %1012 = vmatpush2.msra.mxu0 0.0
      %1013 = vmatprep.subr.mxu0 0.0
      %1014 = vmatpush2.msra.mxu0 0.0
      %1015 = vmatprep.subr.mxu0 0.0
      %1016 = vmatpush2.msra.mxu0 0.0
      %1017 = vmatprep.subr.mxu0 0.0
      %1018 = vmatpush2.msra.mxu0 0.0
      %1019 = vmatprep.subr.mxu0 0.0
      %1020 = vmatpush2.msra.mxu0 0.0
      %1021 = vmatprep.subr.mxu0 0.0
      %1022 = vmatpush2.msra.mxu0 0.0
      %1023 = vmatprep.subr.mxu0 0.0
      %1024 = vmatpush2.msra.mxu0 0.0
      %1025 = vmatprep.subr.mxu0 0.0
      %1026 = vmatpush2.msra.mxu0 0.0
      %1027 = vmatprep.subr.mxu0 0.0
      %1028 = vmatpush2.msra.mxu0 0.0
      %1029 = vmatprep.subr.mxu0 0.0
      %1030 = vmatpush2.msra.mxu0 0.0
      %1031 = vmatprep.subr.mxu0 0.0
      %1032 = vmatpush2.msra.mxu0 0.0
      %1033 = vmatprep.subr.mxu0 0.0
      %1034 = vmatpush2.msra.mxu0 0.0
      %1035 = vmatprep.subr.mxu0 0.0
      %1036 = vmatpush2.msra.mxu0 0.0
      %1037 = vmatprep.subr.mxu0 0.0
      %1038 = vmatpush2.msra.mxu0 0.0
      %1039 = vmatprep.subr.mxu0 0.0
      %1040 = vmatpush2.msra.mxu0 0.0
      %1041 = vmatprep.subr.mxu0 0.0
      %1042 = vmatpush2.msra.mxu0 0.0
      %1043 = vmatprep.mubr.f32.mxu0 0.0
      %1044 = vmatmul.mubr.f32.gmra.mxu0 %v932
      %v1045 = vpop.f32.mrf.mxu0
      %v1046 = vadd.f32 0.0, %v1045
      %v1047 = vpop.f32.mrf.mxu0
      %1048 = vmatprep.mubr.f32.mxu0 0.0
      %1049 = vmatmul.mubr.f32.gmra.mxu0 %v935
      %v1050 = vpop.f32.mrf.mxu0
      %v1051 = vadd.f32 0.0, %v1050
      %v1052 = vpop.f32.mrf.mxu0
      %1053 = vmatprep.mubr.f32.mxu0 0.0
      %1054 = vmatmul.mubr.f32.gmra.mxu0 %v938
      %v1055 = vpop.f32.mrf.mxu0
      %v1056 = vadd.f32 0.0, %v1055
      %v1057 = vpop.f32.mrf.mxu0
      %1058 = vmatprep.mubr.f32.mxu0 0.0
      %1059 = vmatmul.mubr.f32.gmra.mxu0 %v941
      %v1060 = vpop.f32.mrf.mxu0
      %v1061 = vadd.f32 0.0, %v1060
      %v1062 = vpop.f32.mrf.mxu0
      %1063 = vmatprep.mubr.f32.mxu0 0.0
      %1064 = vmatmul.mubr.f32.gmra.mxu0 %v944
      %v1065 = vpop.f32.mrf.mxu0
      %v1066 = vadd.f32 0.0, %v1065
      %v1067 = vpop.f32.mrf.mxu0
      %1068 = vmatprep.mubr.f32.mxu0 0.0
      %1069 = vmatmul.mubr.f32.gmra.mxu0 %v947
      %v1070 = vpop.f32.mrf.mxu0
      %v1071 = vadd.f32 0.0, %v1070
      %v1072 = vpop.f32.mrf.mxu0
      %1073 = vmatprep.mubr.f32.mxu0 0.0
      %1074 = vmatmul.mubr.f32.gmra.mxu0 %v950
      %v1075 = vpop.f32.mrf.mxu0
      %v1076 = vadd.f32 0.0, %v1075
      %v1077 = vpop.f32.mrf.mxu0
      %1078 = vmatprep.mubr.f32.mxu0 0.0
      %1079 = vmatmul.mubr.f32.gmra.mxu0 %v953
      %v1080 = vpop.f32.mrf.mxu0
      %v1081 = vadd.f32 0.0, %v1080
      %v1082 = vpop.f32.mrf.mxu0
      %1083 = vmatprep.mubr.f32.mxu0 0.0
      %1084 = vmatmul.mubr.f32.gmra.mxu0 %v956
      %v1085 = vpop.f32.mrf.mxu0
      %v1086 = vadd.f32 0.0, %v1085
      %v1087 = vpop.f32.mrf.mxu0
      %1088 = vmatprep.mubr.f32.mxu0 0.0
      %1089 = vmatmul.mubr.f32.gmra.mxu0 %v959
      %v1090 = vpop.f32.mrf.mxu0
      %v1091 = vadd.f32 0.0, %v1090
      %v1092 = vpop.f32.mrf.mxu0
      %1093 = vmatprep.mubr.f32.mxu0 0.0
      %1094 = vmatmul.mubr.f32.gmra.mxu0 %v962
      %v1095 = vpop.f32.mrf.mxu0
      %v1096 = vadd.f32 0.0, %v1095
      %v1097 = vpop.f32.mrf.mxu0
      %1098 = vmatprep.mubr.f32.mxu0 0.0
      %1099 = vmatmul.mubr.f32.gmra.mxu0 %v965
      %v1100 = vpop.f32.mrf.mxu0
      %v1101 = vadd.f32 0.0, %v1100
      %v1102 = vpop.f32.mrf.mxu0
      %1103 = vmatprep.mubr.f32.mxu0 0.0
      %1104 = vmatmul.mubr.f32.gmra.mxu0 %v968
      %v1105 = vpop.f32.mrf.mxu0
      %v1106 = vadd.f32 0.0, %v1105
      %v1107 = vpop.f32.mrf.mxu0
      %1108 = vmatprep.mubr.f32.mxu0 0.0
      %1109 = vmatmul.mubr.f32.gmra.mxu0 %v971
      %v1110 = vpop.f32.mrf.mxu0
      %v1111 = vadd.f32 0.0, %v1110
      %v1112 = vpop.f32.mrf.mxu0
      %1113 = vmatprep.mubr.f32.mxu0 0.0
      %1114 = vmatmul.mubr.f32.gmra.mxu0 %v974
      %v1115 = vpop.f32.mrf.mxu0
      %v1116 = vadd.f32 0.0, %v1115
      %v1117 = vpop.f32.mrf.mxu0
      %1118 = vmatprep.mubr.f32.mxu0 0.0
      %1119 = vmatmul.mubr.f32.gmra.mxu0 %v977
      %v1120 = vpop.f32.mrf.mxu0
      %v1121 = vadd.f32 0.0, %v1120
      %v1122 = vpop.f32.mrf.mxu0
      %1123 = vdwg.mxu0
      %v1124 = vadd.f32 %v835, %v1046
      %v1125 = vadd.f32 %v840, %v1051
      %v1126 = vadd.f32 %v845, %v1056
      %v1127 = vadd.f32 %v850, %v1061
      %v1128 = vadd.f32 %v855, %v1066
      %v1129 = vadd.f32 %v860, %v1071
      %v1130 = vadd.f32 %v865, %v1076
      %v1131 = vadd.f32 %v870, %v1081
      %v1132 = vadd.f32 %v875, %v1086
      %v1133 = vadd.f32 %v880, %v1091
      %v1134 = vadd.f32 %v885, %v1096
      %v1135 = vadd.f32 %v890, %v1101
      %v1136 = vadd.f32 %v895, %v1106
      %v1137 = vadd.f32 %v900, %v1111
      %v1138 = vadd.f32 %v905, %v1116
      %v1139 = vadd.f32 %v910, %v1121
      %v1140 = vld [vmem:[%s6] sm:$0x1]
      %v1142 = vlaneseq
      %v1143 = vshrl.u32 %v1142, 7
      %v1144 = vsub.s32 0, %v1143
      %v1145 = vrot.slane %v1140, %v1144
      %v1147 = vadd.f32 %v1124, %v1145
      %v1148 = vadd.f32 %v1125, %v1145
      %v1149 = vadd.f32 %v1126, %v1145
      %v1150 = vadd.f32 %v1127, %v1145
      %v1151 = vadd.f32 %v1128, %v1145
      %v1152 = vadd.f32 %v1129, %v1145
      %v1153 = vadd.f32 %v1130, %v1145
      %v1154 = vadd.f32 %v1131, %v1145
      %v1155 = vadd.f32 %v1132, %v1145
      %v1156 = vadd.f32 %v1133, %v1145
      %v1157 = vadd.f32 %v1134, %v1145
      %v1158 = vadd.f32 %v1135, %v1145
      %v1159 = vadd.f32 %v1136, %v1145
      %v1160 = vadd.f32 %v1137, %v1145
      %v1161 = vadd.f32 %v1138, %v1145
      %v1162 = vadd.f32 %v1139, %v1145
      %v1163 = vmax.f32 %v1147, 0.0
      %v1164 = vmax.f32 %v1148, 0.0
      %v1165 = vmax.f32 %v1149, 0.0
      %v1166 = vmax.f32 %v1150, 0.0
      %v1167 = vmax.f32 %v1151, 0.0
      %v1168 = vmax.f32 %v1152, 0.0
      %v1169 = vmax.f32 %v1153, 0.0
      %v1170 = vmax.f32 %v1154, 0.0
      %v1171 = vmax.f32 %v1155, 0.0
      %v1172 = vmax.f32 %v1156, 0.0
      %v1173 = vmax.f32 %v1157, 0.0
      %v1174 = vmax.f32 %v1158, 0.0
      %v1175 = vmax.f32 %v1159, 0.0
      %v1176 = vmax.f32 %v1160, 0.0
      %v1177 = vmax.f32 %v1161, 0.0
      %v1178 = vmax.f32 %v1162, 0.0
      %v1179 = vld [vmem:[%s7] sm:$0xff]
      %v1180 = vld [vmem:[%s7 + $0x8] sm:$0xff]
      %v1181 = vld [vmem:[%s7 + $0x10] sm:$0xff]
      %v1182 = vld [vmem:[%s7 + $0x18] sm:$0xff]
      %v1183 = vld [vmem:[%s8] sm:$0x1]
      %v1185 = vlaneseq
      %v1186 = vshrl.u32 %v1185, 7
      %v1187 = vsub.s32 0, %v1186
      %v1188 = vrot.slane %v1183, %v1187
      %vm1190 = vcmask 261120
      %v1192 = vsel %vm1190, %v1163, 0
      %v1195 = vsel %vm1190, %v1164, 0
      %v1198 = vsel %vm1190, %v1165, 0
      %v1201 = vsel %vm1190, %v1166, 0
      %v1204 = vsel %vm1190, %v1167, 0
      %v1207 = vsel %vm1190, %v1168, 0
      %v1210 = vsel %vm1190, %v1169, 0
      %v1213 = vsel %vm1190, %v1170, 0
      %v1216 = vsel %vm1190, %v1171, 0
      %v1219 = vsel %vm1190, %v1172, 0
      %v1222 = vsel %vm1190, %v1173, 0
      %v1225 = vsel %vm1190, %v1174, 0
      %v1228 = vsel %vm1190, %v1175, 0
      %v1231 = vsel %vm1190, %v1176, 0
      %v1234 = vsel %vm1190, %v1177, 0
      %v1237 = vsel %vm1190, %v1178, 0
      %1239 = vmatprep.subr.mxu0 0.0
      %1240 = vmatpush1.msra.mxu0 0.0
      %1241 = vmatprep.subr.mxu0 0.0
      %1242 = vmatpush1.msra.mxu0 0.0
      %1243 = vmatprep.subr.mxu0 0.0
      %1244 = vmatpush1.msra.mxu0 0.0
      %1245 = vmatprep.subr.mxu0 0.0
      %1246 = vmatpush1.msra.mxu0 0.0
      %1247 = vmatprep.subr.mxu0 0.0
      %1248 = vmatpush1.msra.mxu0 0.0
      %1249 = vmatprep.subr.mxu0 0.0
      %1250 = vmatpush1.msra.mxu0 0.0
      %1251 = vmatprep.subr.mxu0 0.0
      %1252 = vmatpush1.msra.mxu0 0.0
      %1253 = vmatprep.subr.mxu0 0.0
      %1254 = vmatpush1.msra.mxu0 0.0
      %1255 = vmatprep.subr.mxu0 0.0
      %1256 = vmatpush1.msra.mxu0 0.0
      %1257 = vmatprep.subr.mxu0 0.0
      %1258 = vmatpush1.msra.mxu0 0.0
      %1259 = vmatprep.subr.mxu0 0.0
      %1260 = vmatpush1.msra.mxu0 0.0
      %1261 = vmatprep.subr.mxu0 0.0
      %1262 = vmatpush1.msra.mxu0 0.0
      %1263 = vmatprep.subr.mxu0 0.0
      %1264 = vmatpush1.msra.mxu0 %v1182
      %1265 = vmatprep.subr.mxu0 0.0
      %1266 = vmatpush1.msra.mxu0 %v1181
      %1267 = vmatprep.subr.mxu0 0.0
      %1268 = vmatpush1.msra.mxu0 %v1180
      %1269 = vmatprep.subr.mxu0 0.0
      %1270 = vmatpush1.msra.mxu0 %v1179
      %1271 = vmatprep.subr.mxu0 0.0
      %1272 = vmatpush2.msra.mxu0 0.0
      %1273 = vmatprep.subr.mxu0 0.0
      %1274 = vmatpush2.msra.mxu0 0.0
      %1275 = vmatprep.subr.mxu0 0.0
      %1276 = vmatpush2.msra.mxu0 0.0
      %1277 = vmatprep.subr.mxu0 0.0
      %1278 = vmatpush2.msra.mxu0 0.0
      %1279 = vmatprep.subr.mxu0 0.0
      %1280 = vmatpush2.msra.mxu0 0.0
      %1281 = vmatprep.subr.mxu0 0.0
      %1282 = vmatpush2.msra.mxu0 0.0
      %1283 = vmatprep.subr.mxu0 0.0
      %1284 = vmatpush2.msra.mxu0 0.0
      %1285 = vmatprep.subr.mxu0 0.0
      %1286 = vmatpush2.msra.mxu0 0.0
      %1287 = vmatprep.subr.mxu0 0.0
      %1288 = vmatpush2.msra.mxu0 0.0
      %1289 = vmatprep.subr.mxu0 0.0
      %1290 = vmatpush2.msra.mxu0 0.0
      %1291 = vmatprep.subr.mxu0 0.0
      %1292 = vmatpush2.msra.mxu0 0.0
      %1293 = vmatprep.subr.mxu0 0.0
      %1294 = vmatpush2.msra.mxu0 0.0
      %1295 = vmatprep.subr.mxu0 0.0
      %1296 = vmatpush2.msra.mxu0 0.0
      %1297 = vmatprep.subr.mxu0 0.0
      %1298 = vmatpush2.msra.mxu0 0.0
      %1299 = vmatprep.subr.mxu0 0.0
      %1300 = vmatpush2.msra.mxu0 0.0
      %1301 = vmatprep.subr.mxu0 0.0
      %1302 = vmatpush2.msra.mxu0 0.0
      %1303 = vmatprep.mubr.f32.mxu0 0.0
      %1304 = vmatmul.mubr.f32.gmra.mxu0 %v1192
      %v1305 = vpop.f32.mrf.mxu0
      %v1306 = vadd.f32 %v1188, %v1305
      %v1307 = vpop.f32.mrf.mxu0
      %1308 = vmatprep.mubr.f32.mxu0 0.0
      %1309 = vmatmul.mubr.f32.gmra.mxu0 %v1195
      %v1310 = vpop.f32.mrf.mxu0
      %v1311 = vadd.f32 %v1188, %v1310
      %v1312 = vpop.f32.mrf.mxu0
      %1313 = vmatprep.mubr.f32.mxu0 0.0
      %1314 = vmatmul.mubr.f32.gmra.mxu0 %v1198
      %v1315 = vpop.f32.mrf.mxu0
      %v1316 = vadd.f32 %v1188, %v1315
      %v1317 = vpop.f32.mrf.mxu0
      %1318 = vmatprep.mubr.f32.mxu0 0.0
      %1319 = vmatmul.mubr.f32.gmra.mxu0 %v1201
      %v1320 = vpop.f32.mrf.mxu0
      %v1321 = vadd.f32 %v1188, %v1320
      %v1322 = vpop.f32.mrf.mxu0
      %1323 = vmatprep.mubr.f32.mxu0 0.0
      %1324 = vmatmul.mubr.f32.gmra.mxu0 %v1204
      %v1325 = vpop.f32.mrf.mxu0
      %v1326 = vadd.f32 %v1188, %v1325
      %v1327 = vpop.f32.mrf.mxu0
      %1328 = vmatprep.mubr.f32.mxu0 0.0
      %1329 = vmatmul.mubr.f32.gmra.mxu0 %v1207
      %v1330 = vpop.f32.mrf.mxu0
      %v1331 = vadd.f32 %v1188, %v1330
      %v1332 = vpop.f32.mrf.mxu0
      %1333 = vmatprep.mubr.f32.mxu0 0.0
      %1334 = vmatmul.mubr.f32.gmra.mxu0 %v1210
      %v1335 = vpop.f32.mrf.mxu0
      %v1336 = vadd.f32 %v1188, %v1335
      %v1337 = vpop.f32.mrf.mxu0
      %1338 = vmatprep.mubr.f32.mxu0 0.0
      %1339 = vmatmul.mubr.f32.gmra.mxu0 %v1213
      %v1340 = vpop.f32.mrf.mxu0
      %v1341 = vadd.f32 %v1188, %v1340
      %v1342 = vpop.f32.mrf.mxu0
      %1343 = vmatprep.mubr.f32.mxu0 0.0
      %1344 = vmatmul.mubr.f32.gmra.mxu0 %v1216
      %v1345 = vpop.f32.mrf.mxu0
      %v1346 = vadd.f32 %v1188, %v1345
      %v1347 = vpop.f32.mrf.mxu0
      %1348 = vmatprep.mubr.f32.mxu0 0.0
      %1349 = vmatmul.mubr.f32.gmra.mxu0 %v1219
      %v1350 = vpop.f32.mrf.mxu0
      %v1351 = vadd.f32 %v1188, %v1350
      %v1352 = vpop.f32.mrf.mxu0
      %1353 = vmatprep.mubr.f32.mxu0 0.0
      %1354 = vmatmul.mubr.f32.gmra.mxu0 %v1222
      %v1355 = vpop.f32.mrf.mxu0
      %v1356 = vadd.f32 %v1188, %v1355
      %v1357 = vpop.f32.mrf.mxu0
      %1358 = vmatprep.mubr.f32.mxu0 0.0
      %1359 = vmatmul.mubr.f32.gmra.mxu0 %v1225
      %v1360 = vpop.f32.mrf.mxu0
      %v1361 = vadd.f32 %v1188, %v1360
      %v1362 = vpop.f32.mrf.mxu0
      %1363 = vmatprep.mubr.f32.mxu0 0.0
      %1364 = vmatmul.mubr.f32.gmra.mxu0 %v1228
      %v1365 = vpop.f32.mrf.mxu0
      %v1366 = vadd.f32 %v1188, %v1365
      %v1367 = vpop.f32.mrf.mxu0
      %1368 = vmatprep.mubr.f32.mxu0 0.0
      %1369 = vmatmul.mubr.f32.gmra.mxu0 %v1231
      %v1370 = vpop.f32.mrf.mxu0
      %v1371 = vadd.f32 %v1188, %v1370
      %v1372 = vpop.f32.mrf.mxu0
      %1373 = vmatprep.mubr.f32.mxu0 0.0
      %1374 = vmatmul.mubr.f32.gmra.mxu0 %v1234
      %v1375 = vpop.f32.mrf.mxu0
      %v1376 = vadd.f32 %v1188, %v1375
      %v1377 = vpop.f32.mrf.mxu0
      %1378 = vmatprep.mubr.f32.mxu0 0.0
      %1379 = vmatmul.mubr.f32.gmra.mxu0 %v1237
      %v1380 = vpop.f32.mrf.mxu0
      %v1381 = vadd.f32 %v1188, %v1380
      %v1382 = vpop.f32.mrf.mxu0
      %1383 = vdwg.mxu0
      %v1384 = vmax.f32 %v1306, 0.0
      %v1385 = vmax.f32 %v1311, 0.0
      %v1386 = vmax.f32 %v1316, 0.0
      %v1387 = vmax.f32 %v1321, 0.0
      %v1388 = vmax.f32 %v1326, 0.0
      %v1389 = vmax.f32 %v1331, 0.0
      %v1390 = vmax.f32 %v1336, 0.0
      %v1391 = vmax.f32 %v1341, 0.0
      %v1392 = vmax.f32 %v1346, 0.0
      %v1393 = vmax.f32 %v1351, 0.0
      %v1394 = vmax.f32 %v1356, 0.0
      %v1395 = vmax.f32 %v1361, 0.0
      %v1396 = vmax.f32 %v1366, 0.0
      %v1397 = vmax.f32 %v1371, 0.0
      %v1398 = vmax.f32 %v1376, 0.0
      %v1399 = vmax.f32 %v1381, 0.0
      %v1400 = vld [vmem:[%s9] sm:$0xff]
      %v1401 = vld [vmem:[%s9 + $0x8] sm:$0xff]
      %v1402 = vld [vmem:[%s9 + $0x10] sm:$0xff]
      %v1403 = vld [vmem:[%s9 + $0x18] sm:$0xff]
      %v1404 = vld [vmem:[%s10] sm:$0x1]
      %v1406 = vlaneseq
      %v1407 = vshrl.u32 %v1406, 7
      %v1408 = vsub.s32 0, %v1407
      %v1409 = vrot.slane %v1404, %v1408
      %v1412 = vsel %vm1190, %v1384, 0
      %v1415 = vsel %vm1190, %v1385, 0
      %v1418 = vsel %vm1190, %v1386, 0
      %v1421 = vsel %vm1190, %v1387, 0
      %v1424 = vsel %vm1190, %v1388, 0
      %v1427 = vsel %vm1190, %v1389, 0
      %v1430 = vsel %vm1190, %v1390, 0
      %v1433 = vsel %vm1190, %v1391, 0
      %v1436 = vsel %vm1190, %v1392, 0
      %v1439 = vsel %vm1190, %v1393, 0
      %v1442 = vsel %vm1190, %v1394, 0
      %v1445 = vsel %vm1190, %v1395, 0
      %v1448 = vsel %vm1190, %v1396, 0
      %v1451 = vsel %vm1190, %v1397, 0
      %v1454 = vsel %vm1190, %v1398, 0
      %v1457 = vsel %vm1190, %v1399, 0
      %1459 = vmatprep.subr.mxu0 0.0
      %1460 = vmatpush1.msra.mxu0 0.0
      %1461 = vmatprep.subr.mxu0 0.0
      %1462 = vmatpush1.msra.mxu0 0.0
      %1463 = vmatprep.subr.mxu0 0.0
      %1464 = vmatpush1.msra.mxu0 0.0
      %1465 = vmatprep.subr.mxu0 0.0
      %1466 = vmatpush1.msra.mxu0 0.0
      %1467 = vmatprep.subr.mxu0 0.0
      %1468 = vmatpush1.msra.mxu0 0.0
      %1469 = vmatprep.subr.mxu0 0.0
      %1470 = vmatpush1.msra.mxu0 0.0
      %1471 = vmatprep.subr.mxu0 0.0
      %1472 = vmatpush1.msra.mxu0 0.0
      %1473 = vmatprep.subr.mxu0 0.0
      %1474 = vmatpush1.msra.mxu0 0.0
      %1475 = vmatprep.subr.mxu0 0.0
      %1476 = vmatpush1.msra.mxu0 0.0
      %1477 = vmatprep.subr.mxu0 0.0
      %1478 = vmatpush1.msra.mxu0 0.0
      %1479 = vmatprep.subr.mxu0 0.0
      %1480 = vmatpush1.msra.mxu0 0.0
      %1481 = vmatprep.subr.mxu0 0.0
      %1482 = vmatpush1.msra.mxu0 0.0
      %1483 = vmatprep.subr.mxu0 0.0
      %1484 = vmatpush1.msra.mxu0 %v1403
      %1485 = vmatprep.subr.mxu0 0.0
      %1486 = vmatpush1.msra.mxu0 %v1402
      %1487 = vmatprep.subr.mxu0 0.0
      %1488 = vmatpush1.msra.mxu0 %v1401
      %1489 = vmatprep.subr.mxu0 0.0
      %1490 = vmatpush1.msra.mxu0 %v1400
      %1491 = vmatprep.subr.mxu0 0.0
      %1492 = vmatpush2.msra.mxu0 0.0
      %1493 = vmatprep.subr.mxu0 0.0
      %1494 = vmatpush2.msra.mxu0 0.0
      %1495 = vmatprep.subr.mxu0 0.0
      %1496 = vmatpush2.msra.mxu0 0.0
      %1497 = vmatprep.subr.mxu0 0.0
      %1498 = vmatpush2.msra.mxu0 0.0
      %1499 = vmatprep.subr.mxu0 0.0
      %1500 = vmatpush2.msra.mxu0 0.0
      %1501 = vmatprep.subr.mxu0 0.0
      %1502 = vmatpush2.msra.mxu0 0.0
      %1503 = vmatprep.subr.mxu0 0.0
      %1504 = vmatpush2.msra.mxu0 0.0
      %1505 = vmatprep.subr.mxu0 0.0
      %1506 = vmatpush2.msra.mxu0 0.0
      %1507 = vmatprep.subr.mxu0 0.0
      %1508 = vmatpush2.msra.mxu0 0.0
      %1509 = vmatprep.subr.mxu0 0.0
      %1510 = vmatpush2.msra.mxu0 0.0
      %1511 = vmatprep.subr.mxu0 0.0
      %1512 = vmatpush2.msra.mxu0 0.0
      %1513 = vmatprep.subr.mxu0 0.0
      %1514 = vmatpush2.msra.mxu0 0.0
      %1515 = vmatprep.subr.mxu0 0.0
      %1516 = vmatpush2.msra.mxu0 0.0
      %1517 = vmatprep.subr.mxu0 0.0
      %1518 = vmatpush2.msra.mxu0 0.0
      %1519 = vmatprep.subr.mxu0 0.0
      %1520 = vmatpush2.msra.mxu0 0.0
      %1521 = vmatprep.subr.mxu0 0.0
      %1522 = vmatpush2.msra.mxu0 0.0
      %1523 = vmatprep.mubr.f32.mxu0 0.0
      %1524 = vmatmul.mubr.f32.gmra.mxu0 %v1412
      %v1525 = vpop.f32.mrf.mxu0
      %v1526 = vadd.f32 %v1409, %v1525
      %v1527 = vpop.f32.mrf.mxu0
      %1528 = vmatprep.mubr.f32.mxu0 0.0
      %1529 = vmatmul.mubr.f32.gmra.mxu0 %v1415
      %v1530 = vpop.f32.mrf.mxu0
      %v1531 = vadd.f32 %v1409, %v1530
      %v1532 = vpop.f32.mrf.mxu0
      %1533 = vmatprep.mubr.f32.mxu0 0.0
      %1534 = vmatmul.mubr.f32.gmra.mxu0 %v1418
      %v1535 = vpop.f32.mrf.mxu0
      %v1536 = vadd.f32 %v1409, %v1535
      %v1537 = vpop.f32.mrf.mxu0
      %1538 = vmatprep.mubr.f32.mxu0 0.0
      %1539 = vmatmul.mubr.f32.gmra.mxu0 %v1421
      %v1540 = vpop.f32.mrf.mxu0
      %v1541 = vadd.f32 %v1409, %v1540
      %v1542 = vpop.f32.mrf.mxu0
      %1543 = vmatprep.mubr.f32.mxu0 0.0
      %1544 = vmatmul.mubr.f32.gmra.mxu0 %v1424
      %v1545 = vpop.f32.mrf.mxu0
      %v1546 = vadd.f32 %v1409, %v1545
      %v1547 = vpop.f32.mrf.mxu0
      %1548 = vmatprep.mubr.f32.mxu0 0.0
      %1549 = vmatmul.mubr.f32.gmra.mxu0 %v1427
      %v1550 = vpop.f32.mrf.mxu0
      %v1551 = vadd.f32 %v1409, %v1550
      %v1552 = vpop.f32.mrf.mxu0
      %1553 = vmatprep.mubr.f32.mxu0 0.0
      %1554 = vmatmul.mubr.f32.gmra.mxu0 %v1430
      %v1555 = vpop.f32.mrf.mxu0
      %v1556 = vadd.f32 %v1409, %v1555
      %v1557 = vpop.f32.mrf.mxu0
      %1558 = vmatprep.mubr.f32.mxu0 0.0
      %1559 = vmatmul.mubr.f32.gmra.mxu0 %v1433
      %v1560 = vpop.f32.mrf.mxu0
      %v1561 = vadd.f32 %v1409, %v1560
      %v1562 = vpop.f32.mrf.mxu0
      %1563 = vmatprep.mubr.f32.mxu0 0.0
      %1564 = vmatmul.mubr.f32.gmra.mxu0 %v1436
      %v1565 = vpop.f32.mrf.mxu0
      %v1566 = vadd.f32 %v1409, %v1565
      %v1567 = vpop.f32.mrf.mxu0
      %1568 = vmatprep.mubr.f32.mxu0 0.0
      %1569 = vmatmul.mubr.f32.gmra.mxu0 %v1439
      %v1570 = vpop.f32.mrf.mxu0
      %v1571 = vadd.f32 %v1409, %v1570
      %v1572 = vpop.f32.mrf.mxu0
      %1573 = vmatprep.mubr.f32.mxu0 0.0
      %1574 = vmatmul.mubr.f32.gmra.mxu0 %v1442
      %v1575 = vpop.f32.mrf.mxu0
      %v1576 = vadd.f32 %v1409, %v1575
      %v1577 = vpop.f32.mrf.mxu0
      %1578 = vmatprep.mubr.f32.mxu0 0.0
      %1579 = vmatmul.mubr.f32.gmra.mxu0 %v1445
      %v1580 = vpop.f32.mrf.mxu0
      %v1581 = vadd.f32 %v1409, %v1580
      %v1582 = vpop.f32.mrf.mxu0
      %1583 = vmatprep.mubr.f32.mxu0 0.0
      %1584 = vmatmul.mubr.f32.gmra.mxu0 %v1448
      %v1585 = vpop.f32.mrf.mxu0
      %v1586 = vadd.f32 %v1409, %v1585
      %v1587 = vpop.f32.mrf.mxu0
      %1588 = vmatprep.mubr.f32.mxu0 0.0
      %1589 = vmatmul.mubr.f32.gmra.mxu0 %v1451
      %v1590 = vpop.f32.mrf.mxu0
      %v1591 = vadd.f32 %v1409, %v1590
      %v1592 = vpop.f32.mrf.mxu0
      %1593 = vmatprep.mubr.f32.mxu0 0.0
      %1594 = vmatmul.mubr.f32.gmra.mxu0 %v1454
      %v1595 = vpop.f32.mrf.mxu0
      %v1596 = vadd.f32 %v1409, %v1595
      %v1597 = vpop.f32.mrf.mxu0
      %1598 = vmatprep.mubr.f32.mxu0 0.0
      %1599 = vmatmul.mubr.f32.gmra.mxu0 %v1457
      %v1600 = vpop.f32.mrf.mxu0
      %v1601 = vadd.f32 %v1409, %v1600
      %v1602 = vpop.f32.mrf.mxu0
      %1603 = vdwg.mxu0
      %v1604 = vsel %vm526, %v1526, 0.0
      %1605 = vadd.xlane.f32.xlu0 %v1604
      %v1606 = vpop.xlane.xlu0 %1605
      %v1607 = vsel %vm526, %v1531, 0.0
      %1608 = vadd.xlane.f32.xlu0 %v1607
      %v1609 = vpop.xlane.xlu0 %1608
      %v1610 = vsel %vm526, %v1536, 0.0
      %1611 = vadd.xlane.f32.xlu0 %v1610
      %v1612 = vpop.xlane.xlu0 %1611
      %v1613 = vsel %vm526, %v1541, 0.0
      %1614 = vadd.xlane.f32.xlu0 %v1613
      %v1615 = vpop.xlane.xlu0 %1614
      %v1616 = vsel %vm526, %v1546, 0.0
      %1617 = vadd.xlane.f32.xlu0 %v1616
      %v1618 = vpop.xlane.xlu0 %1617
      %v1619 = vsel %vm526, %v1551, 0.0
      %1620 = vadd.xlane.f32.xlu0 %v1619
      %v1621 = vpop.xlane.xlu0 %1620
      %v1622 = vsel %vm526, %v1556, 0.0
      %1623 = vadd.xlane.f32.xlu0 %v1622
      %v1624 = vpop.xlane.xlu0 %1623
      %v1625 = vsel %vm526, %v1561, 0.0
      %1626 = vadd.xlane.f32.xlu0 %v1625
      %v1627 = vpop.xlane.xlu0 %1626
      %v1628 = vsel %vm526, %v1566, 0.0
      %1629 = vadd.xlane.f32.xlu0 %v1628
      %v1630 = vpop.xlane.xlu0 %1629
      %v1631 = vsel %vm526, %v1571, 0.0
      %1632 = vadd.xlane.f32.xlu0 %v1631
      %v1633 = vpop.xlane.xlu0 %1632
      %v1634 = vsel %vm526, %v1576, 0.0
      %1635 = vadd.xlane.f32.xlu0 %v1634
      %v1636 = vpop.xlane.xlu0 %1635
      %v1637 = vsel %vm526, %v1581, 0.0
      %1638 = vadd.xlane.f32.xlu0 %v1637
      %v1639 = vpop.xlane.xlu0 %1638
      %v1640 = vsel %vm526, %v1586, 0.0
      %1641 = vadd.xlane.f32.xlu0 %v1640
      %v1642 = vpop.xlane.xlu0 %1641
      %v1643 = vsel %vm526, %v1591, 0.0
      %1644 = vadd.xlane.f32.xlu0 %v1643
      %v1645 = vpop.xlane.xlu0 %1644
      %v1646 = vsel %vm526, %v1596, 0.0
      %1647 = vadd.xlane.f32.xlu0 %v1646
      %v1648 = vpop.xlane.xlu0 %1647
      %v1649 = vsel %vm526, %v1601, 0.0
      %1650 = vadd.xlane.f32.xlu0 %v1649
      %v1651 = vpop.xlane.xlu0 %1650
      %v1652 = vrcp.pop 16.0
      %v1653 = vmul.f32 %v1606, %v1652
      %v1654 = vmul.f32 %v1609, %v1652
      %v1655 = vmul.f32 %v1612, %v1652
      %v1656 = vmul.f32 %v1615, %v1652
      %v1657 = vmul.f32 %v1618, %v1652
      %v1658 = vmul.f32 %v1621, %v1652
      %v1659 = vmul.f32 %v1624, %v1652
      %v1660 = vmul.f32 %v1627, %v1652
      %v1661 = vmul.f32 %v1630, %v1652
      %v1662 = vmul.f32 %v1633, %v1652
      %v1663 = vmul.f32 %v1636, %v1652
      %v1664 = vmul.f32 %v1639, %v1652
      %v1665 = vmul.f32 %v1642, %v1652
      %v1666 = vmul.f32 %v1645, %v1652
      %v1667 = vmul.f32 %v1648, %v1652
      %v1668 = vmul.f32 %v1651, %v1652
      %v1669 = vsub.f32 %v1526, %v1653
      %v1670 = vsub.f32 %v1531, %v1654
      %v1671 = vsub.f32 %v1536, %v1655
      %v1672 = vsub.f32 %v1541, %v1656
      %v1673 = vsub.f32 %v1546, %v1657
      %v1674 = vsub.f32 %v1551, %v1658
      %v1675 = vsub.f32 %v1556, %v1659
      %v1676 = vsub.f32 %v1561, %v1660
      %v1677 = vsub.f32 %v1566, %v1661
      %v1678 = vsub.f32 %v1571, %v1662
      %v1679 = vsub.f32 %v1576, %v1663
      %v1680 = vsub.f32 %v1581, %v1664
      %v1681 = vsub.f32 %v1586, %v1665
      %v1682 = vsub.f32 %v1591, %v1666
      %v1683 = vsub.f32 %v1596, %v1667
      %v1684 = vsub.f32 %v1601, %v1668
      %v1685 = vmul.f32 %v1669, %v1669
      %v1686 = vmul.f32 %v1670, %v1670
      %v1687 = vmul.f32 %v1671, %v1671
      %v1688 = vmul.f32 %v1672, %v1672
      %v1689 = vmul.f32 %v1673, %v1673
      %v1690 = vmul.f32 %v1674, %v1674
      %v1691 = vmul.f32 %v1675, %v1675
      %v1692 = vmul.f32 %v1676, %v1676
      %v1693 = vmul.f32 %v1677, %v1677
      %v1694 = vmul.f32 %v1678, %v1678
      %v1695 = vmul.f32 %v1679, %v1679
      %v1696 = vmul.f32 %v1680, %v1680
      %v1697 = vmul.f32 %v1681, %v1681
      %v1698 = vmul.f32 %v1682, %v1682
      %v1699 = vmul.f32 %v1683, %v1683
      %v1700 = vmul.f32 %v1684, %v1684
      %v1701 = vsel %vm526, %v1685, 0.0
      %1702 = vadd.xlane.f32.xlu0 %v1701
      %v1703 = vpop.xlane.xlu0 %1702
      %v1704 = vsel %vm526, %v1686, 0.0
      %1705 = vadd.xlane.f32.xlu0 %v1704
      %v1706 = vpop.xlane.xlu0 %1705
      %v1707 = vsel %vm526, %v1687, 0.0
      %1708 = vadd.xlane.f32.xlu0 %v1707
      %v1709 = vpop.xlane.xlu0 %1708
      %v1710 = vsel %vm526, %v1688, 0.0
      %1711 = vadd.xlane.f32.xlu0 %v1710
      %v1712 = vpop.xlane.xlu0 %1711
      %v1713 = vsel %vm526, %v1689, 0.0
      %1714 = vadd.xlane.f32.xlu0 %v1713
      %v1715 = vpop.xlane.xlu0 %1714
      %v1716 = vsel %vm526, %v1690, 0.0
      %1717 = vadd.xlane.f32.xlu0 %v1716
      %v1718 = vpop.xlane.xlu0 %1717
      %v1719 = vsel %vm526, %v1691, 0.0
      %1720 = vadd.xlane.f32.xlu0 %v1719
      %v1721 = vpop.xlane.xlu0 %1720
      %v1722 = vsel %vm526, %v1692, 0.0
      %1723 = vadd.xlane.f32.xlu0 %v1722
      %v1724 = vpop.xlane.xlu0 %1723
      %v1725 = vsel %vm526, %v1693, 0.0
      %1726 = vadd.xlane.f32.xlu0 %v1725
      %v1727 = vpop.xlane.xlu0 %1726
      %v1728 = vsel %vm526, %v1694, 0.0
      %1729 = vadd.xlane.f32.xlu0 %v1728
      %v1730 = vpop.xlane.xlu0 %1729
      %v1731 = vsel %vm526, %v1695, 0.0
      %1732 = vadd.xlane.f32.xlu0 %v1731
      %v1733 = vpop.xlane.xlu0 %1732
      %v1734 = vsel %vm526, %v1696, 0.0
      %1735 = vadd.xlane.f32.xlu0 %v1734
      %v1736 = vpop.xlane.xlu0 %1735
      %v1737 = vsel %vm526, %v1697, 0.0
      %1738 = vadd.xlane.f32.xlu0 %v1737
      %v1739 = vpop.xlane.xlu0 %1738
      %v1740 = vsel %vm526, %v1698, 0.0
      %1741 = vadd.xlane.f32.xlu0 %v1740
      %v1742 = vpop.xlane.xlu0 %1741
      %v1743 = vsel %vm526, %v1699, 0.0
      %1744 = vadd.xlane.f32.xlu0 %v1743
      %v1745 = vpop.xlane.xlu0 %1744
      %v1746 = vsel %vm526, %v1700, 0.0
      %1747 = vadd.xlane.f32.xlu0 %v1746
      %v1748 = vpop.xlane.xlu0 %1747
      %v1749 = vmul.f32 %v1703, %v1652
      %v1750 = vmul.f32 %v1706, %v1652
      %v1751 = vmul.f32 %v1709, %v1652
      %v1752 = vmul.f32 %v1712, %v1652
      %v1753 = vmul.f32 %v1715, %v1652
      %v1754 = vmul.f32 %v1718, %v1652
      %v1755 = vmul.f32 %v1721, %v1652
      %v1756 = vmul.f32 %v1724, %v1652
      %v1757 = vmul.f32 %v1727, %v1652
      %v1758 = vmul.f32 %v1730, %v1652
      %v1759 = vmul.f32 %v1733, %v1652
      %v1760 = vmul.f32 %v1736, %v1652
      %v1761 = vmul.f32 %v1739, %v1652
      %v1762 = vmul.f32 %v1742, %v1652
      %v1763 = vmul.f32 %v1745, %v1652
      %v1764 = vmul.f32 %v1748, %v1652
      %v1765 = vadd.f32 %v1749, 1e-05
      %v1766 = vadd.f32 %v1750, 1e-05
      %v1767 = vadd.f32 %v1751, 1e-05
      %v1768 = vadd.f32 %v1752, 1e-05
      %v1769 = vadd.f32 %v1753, 1e-05
      %v1770 = vadd.f32 %v1754, 1e-05
      %v1771 = vadd.f32 %v1755, 1e-05
      %v1772 = vadd.f32 %v1756, 1e-05
      %v1773 = vadd.f32 %v1757, 1e-05
      %v1774 = vadd.f32 %v1758, 1e-05
      %v1775 = vadd.f32 %v1759, 1e-05
      %v1776 = vadd.f32 %v1760, 1e-05
      %v1777 = vadd.f32 %v1761, 1e-05
      %v1778 = vadd.f32 %v1762, 1e-05
      %v1779 = vadd.f32 %v1763, 1e-05
      %v1780 = vadd.f32 %v1764, 1e-05
      %v1781 = vrsqrt.pop %v1765
      %v1782 = vrsqrt.pop %v1766
      %v1783 = vrsqrt.pop %v1767
      %v1784 = vrsqrt.pop %v1768
      %v1785 = vrsqrt.pop %v1769
      %v1786 = vrsqrt.pop %v1770
      %v1787 = vrsqrt.pop %v1771
      %v1788 = vrsqrt.pop %v1772
      %v1789 = vrsqrt.pop %v1773
      %v1790 = vrsqrt.pop %v1774
      %v1791 = vrsqrt.pop %v1775
      %v1792 = vrsqrt.pop %v1776
      %v1793 = vrsqrt.pop %v1777
      %v1794 = vrsqrt.pop %v1778
      %v1795 = vrsqrt.pop %v1779
      %v1796 = vrsqrt.pop %v1780
      %v1797 = vmul.f32 %v1669, %v1781
      %v1798 = vmul.f32 %v1670, %v1782
      %v1799 = vmul.f32 %v1671, %v1783
      %v1800 = vmul.f32 %v1672, %v1784
      %v1801 = vmul.f32 %v1673, %v1785
      %v1802 = vmul.f32 %v1674, %v1786
      %v1803 = vmul.f32 %v1675, %v1787
      %v1804 = vmul.f32 %v1676, %v1788
      %v1805 = vmul.f32 %v1677, %v1789
      %v1806 = vmul.f32 %v1678, %v1790
      %v1807 = vmul.f32 %v1679, %v1791
      %v1808 = vmul.f32 %v1680, %v1792
      %v1809 = vmul.f32 %v1681, %v1793
      %v1810 = vmul.f32 %v1682, %v1794
      %v1811 = vmul.f32 %v1683, %v1795
      %v1812 = vmul.f32 %v1684, %v1796
      %v1814 = vlaneseq
      %v1815 = vshrl.u32 %v1814, 7
      %v1816 = vsub.s32 0, %v1815
      %v1817 = vrot.slane %v488, %v1816
      %v1819 = vmul.f32 %v1797, %v1817
      %v1820 = vmul.f32 %v1798, %v1817
      %v1821 = vmul.f32 %v1799, %v1817
      %v1822 = vmul.f32 %v1800, %v1817
      %v1823 = vmul.f32 %v1801, %v1817
      %v1824 = vmul.f32 %v1802, %v1817
      %v1825 = vmul.f32 %v1803, %v1817
      %v1826 = vmul.f32 %v1804, %v1817
      %v1827 = vmul.f32 %v1805, %v1817
      %v1828 = vmul.f32 %v1806, %v1817
      %v1829 = vmul.f32 %v1807, %v1817
      %v1830 = vmul.f32 %v1808, %v1817
      %v1831 = vmul.f32 %v1809, %v1817
      %v1832 = vmul.f32 %v1810, %v1817
      %v1833 = vmul.f32 %v1811, %v1817
      %v1834 = vmul.f32 %v1812, %v1817
      %v1836 = vlaneseq
      %v1837 = vshrl.u32 %v1836, 7
      %v1838 = vsub.s32 0, %v1837
      %v1839 = vrot.slane %v489, %v1838
      %v1841 = vadd.f32 %v1819, %v1839
      %v1842 = vadd.f32 %v1820, %v1839
      %v1843 = vadd.f32 %v1821, %v1839
      %v1844 = vadd.f32 %v1822, %v1839
      %v1845 = vadd.f32 %v1823, %v1839
      %v1846 = vadd.f32 %v1824, %v1839
      %v1847 = vadd.f32 %v1825, %v1839
      %v1848 = vadd.f32 %v1826, %v1839
      %v1849 = vadd.f32 %v1827, %v1839
      %v1850 = vadd.f32 %v1828, %v1839
      %v1851 = vadd.f32 %v1829, %v1839
      %v1852 = vadd.f32 %v1830, %v1839
      %v1853 = vadd.f32 %v1831, %v1839
      %v1854 = vadd.f32 %v1832, %v1839
      %v1855 = vadd.f32 %v1833, %v1839
      %v1856 = vadd.f32 %v1834, %v1839
      %1857 = vst.msk [vmem:[%s486] sm:$0xff] %vm526, %v1841
      %1858 = vst.msk [vmem:[%s486 + $0x8] sm:$0xff] %vm526, %v1842
      %1859 = vst.msk [vmem:[%s486 + $0x10] sm:$0xff] %vm526, %v1843
      %1860 = vst.msk [vmem:[%s486 + $0x18] sm:$0xff] %vm526, %v1844
      %1861 = vst.msk [vmem:[%s486 + $0x20] sm:$0xff] %vm526, %v1845
      %1862 = vst.msk [vmem:[%s486 + $0x28] sm:$0xff] %vm526, %v1846
      %1863 = vst.msk [vmem:[%s486 + $0x30] sm:$0xff] %vm526, %v1847
      %1864 = vst.msk [vmem:[%s486 + $0x38] sm:$0xff] %vm526, %v1848
      %1865 = vst.msk [vmem:[%s486 + $0x40] sm:$0xff] %vm526, %v1849
      %1866 = vst.msk [vmem:[%s486 + $0x48] sm:$0xff] %vm526, %v1850
      %1867 = vst.msk [vmem:[%s486 + $0x50] sm:$0xff] %vm526, %v1851
      %1868 = vst.msk [vmem:[%s486 + $0x58] sm:$0xff] %vm526, %v1852
      %1869 = vst.msk [vmem:[%s486 + $0x60] sm:$0xff] %vm526, %v1853
      %1870 = vst.msk [vmem:[%s486 + $0x68] sm:$0xff] %vm526, %v1854
      %1871 = vst.msk [vmem:[%s486 + $0x70] sm:$0xff] %vm526, %v1855
      %1872 = vst.msk [vmem:[%s486 + $0x78] sm:$0xff] %vm526, %v1856
      %s1873 = smul.u32 16, %s24
      %p1874 = scmp.lt.s32.totalorder %s1873, 31
      %s1875 = scalar_select %p1874, %s1873, 31
      %s1876 = smul.addr %s1875, 8
      %s1877 = scalar_lea.vmem %s13, %s1876
      // Predicated region
      $region73: #{tpu_custom_call.1} parent=71 // pred_check
        %p1878 = pneg %p330
      $region74: #{tpu_custom_call.1} parent=71 // pred_check_branch
        %1880 = sbr.rel (%p1878) target = $region76
      $region75: #{tpu_custom_call.1} parent=71 // pred_region
        %s1881 = smul.u32 16, %s24
      $region76: #{tpu_custom_call.1} parent=71 // pred_fallthru
        _
    $region72: #{tpu_custom_call.1} parent=5 // pred_fallthru
      _
    %p1882 = scmp.le.s32.totalorder 2, %s19
    // Predicated region
    $region77: #{tpu_custom_call.1} parent=5 // pred_check
      %p1883 = pneg %p1882
    $region78: #{tpu_custom_call.1} parent=5 // pred_check_branch
      %1885 = sbr.rel (%p1883) target = $region80
    $region79: #{tpu_custom_call.1} parent=5 // pred_region
      %s1886 = ssub.s32 %s19, 2
      // Predicated region
      $region81: #{tpu_custom_call.1} parent=79 // pred_check
        %p1887 = pneg %p336
      $region82: #{tpu_custom_call.1} parent=79 // pred_check_branch
        %1889 = sbr.rel (%p1887) target = $region84
      $region83: #{tpu_custom_call.1} parent=79 // pred_region
        %s1890 = smul.u32 16, %s25
        %p1891 = scmp.lt.s32.totalorder %s1890, 31
        %s1892 = scalar_select %p1891, %s1890, 31
        %s1893 = smul.addr %s1892, 8
        %s1894 = scalar_lea.vmem %s13, %s1893
      $region84: #{tpu_custom_call.1} parent=79 // pred_fallthru
        _
    $region80: #{tpu_custom_call.1} parent=5 // pred_fallthru
      _
  $region6: #{tpu_custom_call.1} parent=0 // loop_footer
    %s23 = sadd.s32 1, %s19
  $region7: #{tpu_custom_call.1} parent=0 // loop_footer_branch
    %18 = sbr.rel target = $region3
  $region8: #{tpu_custom_call.1} parent=0 // loop_exit
    _

</llo_original>
